<compile_context>
chip_gen: v7x
topology: tpu7x:2x2x1
jax: 0.10.0
libtpu: 0.0.40
codegen_flags: <defaults>
</compile_context>

<pallas_src>
import jax
import jax.numpy as jnp
from jax.experimental import pallas as pl
from jax.experimental.pallas import tpu as pltpu


def _round_up(n, m):
    return ((n + m - 1) // m) * m


def _tpu_flavor():
    """Coarse TPU-generation detection (perf knobs only; correctness never depends on it)."""
    try:
        kind = jax.devices()[0].device_kind.lower()
    except Exception:
        kind = ""
    if "v5" in kind and ("lite" in kind or "5e" in kind):
        return "v5e"
    if "7x" in kind or "v7" in kind:
        return "v7x"
    return "v6e"


def _policy_kernel(x_ref,
                   w1_ref, b1_ref,
                   w2_ref, b2_ref,
                   w3_ref, b3_ref,
                   wh_ref, bh_ref,
                   lo_ref, hi_ref,
                   out_ref):
    dt = w1_ref.dtype  # bf16 MXU operand dtype

    # fc1 -> relu  (f32 accumulate, f32 bias/ReLU on the VPU)
    h = jnp.dot(x_ref[...], w1_ref[...], preferred_element_type=jnp.float32) + b1_ref[...]
    h = jnp.maximum(h, 0.0)
    # fc2 -> relu
    h = jnp.dot(h.astype(dt), w2_ref[...], preferred_element_type=jnp.float32) + b2_ref[...]
    h = jnp.maximum(h, 0.0)
    # fc3 -> relu
    h = jnp.dot(h.astype(dt), w3_ref[...], preferred_element_type=jnp.float32) + b3_ref[...]
    h = jnp.maximum(h, 0.0)

    # fused heads: [mean | log_std | value | zero-pad] -> single lane-dense 128-wide slab
    y = jnp.dot(h.astype(dt), wh_ref[...], preferred_element_type=jnp.float32) + bh_ref[...]

    # clamp: only the log_std lanes have finite bounds; all other lanes see (-inf, +inf) -> identity
    y = jnp.minimum(jnp.maximum(y, lo_ref[...]), hi_ref[...])

    out_ref[...] = y.astype(out_ref.dtype)  # bf16 lane-dense writeback


def policy_network_forward(x, params, *, compute_dtype=jnp.bfloat16, batch_tile=None):
    """x: [B, obs_dim] float32. params: dict of (W, b) in PyTorch layout (W: [out, in]).

    Returns (action_mean [B, A], action_log_std [B, A] clamped to [-20, 2], value [B, 1]) as f32.
    """
    B, obs_dim = x.shape
    H = params["fc1"][0].shape[0]
    A = params["policy_mean"][0].shape[0]

    flavor = _tpu_flavor()
    if batch_tile is None:
        # v5e: cap TB (f32 intermediates spill past the vreg file and v5e has one vst slot).
        # v6e/v7x: bigger tiles amortize the ~0.35us per-grid-step pipeline overhead.
        batch_tile = 256 if flavor == "v5e" else 512

    # Padded (lane-dense) problem dimensions.
    K_pad = _round_up(max(obs_dim, 1), 128)
    h_round = 128 if flavor == "v5e" else 256       # v6e/v7x MXU is 256x256-deep
    H_pad = _round_up(H, h_round)
    N_head = max(_round_up(2 * A + 1, 128), 128)

    # Batch tiling: pad B to a multiple of 8 (sublane), then to a multiple of the tile.
    B8 = _round_up(max(B, 1), 8)
    TB = min(batch_tile, B8)
    if flavor == "v7x" and B8 >= 32:
        # Ensure >= 2 grid steps so the "parallel" batch axis shards across both TensorCores.
        TB = min(TB, _round_up(pl.cdiv(B8, 2), 16))
    B_pad = _round_up(B8, TB)
    grid = (pl.cdiv(B_pad, TB),)

    def lin(name, in_pad, out_pad):
        w, b = params[name]
        wt = jnp.pad(w.T, ((0, in_pad - w.shape[1]), (0, out_pad - w.shape[0])))
        bp = jnp.pad(b, (0, out_pad - b.shape[0])).reshape(1, -1)
        return wt.astype(compute_dtype), bp.astype(jnp.float32)

    w1, b1 = lin("fc1", K_pad, H_pad)
    w2, b2 = lin("fc2", H_pad, H_pad)
    w3, b3 = lin("fc3", H_pad, H_pad)

    # Fused head weight [H_pad, N_head] = [mean | log_std | value | 0-pad], bias [1, N_head].
    wm, bm = params["policy_mean"]
    ws, bs = params["policy_log_std"]
    wv, bv = params["value_head"]
    wh = jnp.concatenate([wm.T, ws.T, wv.T], axis=1)             # [H, 2A+1]
    bh = jnp.concatenate([bm, bs, bv], axis=0)                   # [2A+1]
    wh = jnp.pad(wh, ((0, H_pad - H), (0, N_head - wh.shape[1]))).astype(compute_dtype)
    bh = jnp.pad(bh, (0, N_head - bh.shape[0])).reshape(1, -1).astype(jnp.float32)

    # Resident per-lane clamp bounds: finite only on the log_std lanes [A, 2A).
    lane = jnp.arange(N_head)
    is_log_std = (lane >= A) & (lane < 2 * A)
    lo = jnp.where(is_log_std, -20.0, -jnp.inf).reshape(1, -1).astype(jnp.float32)
    hi = jnp.where(is_log_std, 2.0, jnp.inf).reshape(1, -1).astype(jnp.float32)

    xp = jnp.pad(x, ((0, B_pad - B), (0, K_pad - obs_dim))).astype(compute_dtype)

    # VMEM budget derived from actual buffer sizes (upper bound: weights double-buffered),
    # with headroom, clamped to stay portable under v7x's 64 MiB per-TC VMEM.
    elt = jnp.dtype(compute_dtype).itemsize
    w_bytes = (K_pad * H_pad + 2 * H_pad * H_pad + H_pad * N_head) * elt
    b_bytes = (3 * H_pad + 3 * N_head) * 4
    io_bytes = 2 * TB * K_pad * elt + 2 * TB * N_head * 2      # double-buffered x / bf16 out tiles
    scratch_bytes = 2 * TB * H_pad * 4                          # live f32 intermediates (estimate)
    vmem_limit = int(1.5 * (2 * (w_bytes + b_bytes) + io_bytes + scratch_bytes)) + (2 << 20)
    vmem_limit = max(16 << 20, min(vmem_limit, 64 << 20))

    flops = 2 * B_pad * (K_pad * H_pad + 2 * H_pad * H_pad + H_pad * N_head)
    bytes_accessed = (B_pad * K_pad * elt                       # x
                      + w_bytes + b_bytes                       # weights/biases (fetched once)
                      + 2 * N_head * 4                          # lo/hi
                      + B_pad * N_head * 2)                     # bf16 output slab
    cost = pl.CostEstimate(flops=int(flops), transcendentals=0,
                           bytes_accessed=int(bytes_accessed))

    def build_in_specs(single_buffer_weights):
        if single_buffer_weights:
            # Constant index_map -> fetched once; single buffer frees the dead second copy.
            def resident(shape):
                return pl.BlockSpec(shape, lambda i: (0, 0), pipeline_mode=pl.Buffered(1))
        else:
            def resident(shape):
                return pl.BlockSpec(shape, lambda i: (0, 0))
        return [
            pl.BlockSpec((TB, K_pad), lambda i: (i, 0)),          # x tile (pipelined)
            resident((K_pad, H_pad)), resident((1, H_pad)),        # fc1
            resident((H_pad, H_pad)), resident((1, H_pad)),        # fc2
            resident((H_pad, H_pad)), resident((1, H_pad)),        # fc3
            resident((H_pad, N_head)), resident((1, N_head)),      # fused heads
            resident((1, N_head)), resident((1, N_head)),          # clamp lo / hi
        ]

    def make_call(single_buffer_weights):
        return pl.pallas_call(
            _policy_kernel,
            out_shape=jax.ShapeDtypeStruct((B_pad, N_head), jnp.bfloat16),
            grid=grid,
            in_specs=build_in_specs(single_buffer_weights),
            out_specs=pl.BlockSpec((TB, N_head), lambda i: (i, 0)),
            compiler_params=pltpu.CompilerParams(
                dimension_semantics=("parallel",),
                vmem_limit_bytes=vmem_limit,
            ),
            cost_estimate=cost,
        )

    operands = (xp, w1, b1, w2, b2, w3, b3, wh, bh, lo, hi)
    try:
        head_out = make_call(True)(*operands)
    except Exception:
        # Fallback: some Pallas builds may reject pl.Buffered(1); default double-buffering is
        # functionally identical (just uses more VMEM).
        head_out = make_call(False)(*operands)

    action_mean = head_out[:B, :A].astype(jnp.float32)
    action_log_std = head_out[:B, A:2 * A].astype(jnp.float32)
    value = head_out[:B, 2 * A:2 * A + 1].astype(jnp.float32)
    return action_mean, action_log_std, value


def init_params(key, obs_dim, action_dim, hidden_dim=256):
    """Deterministic PyTorch-default-style init: U(-1/sqrt(fan_in), 1/sqrt(fan_in))."""
    def linear(k, out_f, in_f):
        kw, kb = jax.random.split(k)
        bound = 1.0 / jnp.sqrt(in_f)
        w = jax.random.uniform(kw, (out_f, in_f), jnp.float32, -bound, bound)
        b = jax.random.uniform(kb, (out_f,), jnp.float32, -bound, bound)
        return w, b

    keys = jax.random.split(key, 6)
    return {
        "fc1": linear(keys[0], hidden_dim, obs_dim),
        "fc2": linear(keys[1], hidden_dim, hidden_dim),
        "fc3": linear(keys[2], hidden_dim, hidden_dim),
        "policy_mean": linear(keys[3], action_dim, hidden_dim),
        "policy_log_std": linear(keys[4], action_dim, hidden_dim),
        "value_head": linear(keys[5], 1, hidden_dim),
    }


def _reference_forward(x, params, compute_dtype=jnp.bfloat16):
    """Pure-JAX reference mirroring the kernel's bf16-operand / f32-accumulate matmuls."""
    def lin(name, h):
        w, b = params[name]
        return jnp.dot(h.astype(compute_dtype), w.T.astype(compute_dtype),
                       preferred_element_type=jnp.float32) + b
    h = jax.nn.relu(lin("fc1", x))
    h = jax.nn.relu(lin("fc2", h))
    h = jax.nn.relu(lin("fc3", h))
    mean = lin("policy_mean", h)
    log_std = jnp.clip(lin("policy_log_std", h), -20.0, 2.0)
    value = lin("value_head", h)
    return mean, log_std, value


if __name__ == "__main__":
    obs_dim, action_dim, hidden_dim, batch = 16, 4, 64, 8

    key = jax.random.PRNGKey(0)
    key_x, key_p = jax.random.split(key)
    x = jax.random.normal(key_x, (batch, obs_dim), jnp.float32)
    params = init_params(key_p, obs_dim, action_dim, hidden_dim)

    mean, log_std, value = policy_network_forward(x, params)
    jax.block_until_ready((mean, log_std, value))

    assert mean.shape == (batch, action_dim)
    assert log_std.shape == (batch, action_dim)
    assert value.shape == (batch, 1)

    ref_mean, ref_log_std, ref_value = _reference_forward(x, params)
    assert jnp.allclose(mean, ref_mean, atol=1e-2, rtol=1e-2)
    assert jnp.allclose(log_std, ref_log_std, atol=1e-2, rtol=1e-2)
    assert jnp.allclose(value, ref_value, atol=1e-2, rtol=1e-2)
    assert bool(jnp.all(log_std >= -20.0)) and bool(jnp.all(log_std <= 2.0))

    print("KERNEL_OK")
</pallas_src>

<mosaic_0001>
module attributes {stable_mosaic.version = 11 : i64} {
  func.func @_policy_kernel(%arg0: i32, %arg1: memref<8x128xbf16, #tpu.memory_space<vmem>>, %arg2: memref<128x256xbf16, #tpu.memory_space<vmem>>, %arg3: memref<1x256xf32, #tpu.memory_space<vmem>>, %arg4: memref<256x256xbf16, #tpu.memory_space<vmem>>, %arg5: memref<1x256xf32, #tpu.memory_space<vmem>>, %arg6: memref<256x256xbf16, #tpu.memory_space<vmem>>, %arg7: memref<1x256xf32, #tpu.memory_space<vmem>>, %arg8: memref<256x128xbf16, #tpu.memory_space<vmem>>, %arg9: memref<1x128xf32, #tpu.memory_space<vmem>>, %arg10: memref<1x128xf32, #tpu.memory_space<vmem>>, %arg11: memref<1x128xf32, #tpu.memory_space<vmem>>, %arg12: memref<8x128xbf16, #tpu.memory_space<vmem>>) attributes {dimension_semantics = [#tpu.dimension_semantics<parallel>], iteration_bounds = array<i64: 1>, scalar_prefetch = 0 : i64, scratch_operands = 0 : i64, tpu.core_type = #tpu.core_type<tc>, window_params = [{transform_indices = @transform_0, window_bounds = array<i64: 8, 128>}, {pipeline_mode = #tpu.pipeline_mode<synchronous>, transform_indices = @transform_1, window_bounds = array<i64: 128, 256>}, {pipeline_mode = #tpu.pipeline_mode<synchronous>, transform_indices = @transform_2, window_bounds = array<i64: 1, 256>}, {pipeline_mode = #tpu.pipeline_mode<synchronous>, transform_indices = @transform_3, window_bounds = array<i64: 256, 256>}, {pipeline_mode = #tpu.pipeline_mode<synchronous>, transform_indices = @transform_4, window_bounds = array<i64: 1, 256>}, {pipeline_mode = #tpu.pipeline_mode<synchronous>, transform_indices = @transform_5, window_bounds = array<i64: 256, 256>}, {pipeline_mode = #tpu.pipeline_mode<synchronous>, transform_indices = @transform_6, window_bounds = array<i64: 1, 256>}, {pipeline_mode = #tpu.pipeline_mode<synchronous>, transform_indices = @transform_7, window_bounds = array<i64: 256, 128>}, {pipeline_mode = #tpu.pipeline_mode<synchronous>, transform_indices = @transform_8, window_bounds = array<i64: 1, 128>}, {pipeline_mode = #tpu.pipeline_mode<synchronous>, transform_indices = @transform_9, window_bounds = array<i64: 1, 128>}, {pipeline_mode = #tpu.pipeline_mode<synchronous>, transform_indices = @transform_10, window_bounds = array<i64: 1, 128>}, {transform_indices = @transform_11, window_bounds = array<i64: 8, 128>}]} {
    %c0 = arith.constant 0 : index
    %c0_0 = arith.constant 0 : index
    %0 = vector.load %arg1[%c0, %c0_0] : memref<8x128xbf16, #tpu.memory_space<vmem>>, vector<8x128xbf16>
    %c0_1 = arith.constant 0 : index
    %c0_2 = arith.constant 0 : index
    %1 = vector.load %arg2[%c0_1, %c0_2] : memref<128x256xbf16, #tpu.memory_space<vmem>>, vector<128x256xbf16>
    %cst = arith.constant dense<0.000000e+00> : vector<8x256xf32>
    %2 = tpu.matmul %0, %1, %cst {dimension_numbers = #tpu.dot_dimension_numbers<[1], [0], [0], [1], [0, 0, 1, 1], [], []>} : vector<8x128xbf16>, vector<128x256xbf16>, vector<8x256xf32> -> vector<8x256xf32>
    %c0_3 = arith.constant 0 : index
    %c0_4 = arith.constant 0 : index
    %3 = vector.load %arg3[%c0_3, %c0_4] : memref<1x256xf32, #tpu.memory_space<vmem>>, vector<1x256xf32>
    %4 = vector.broadcast %3 : vector<1x256xf32> to vector<8x256xf32>
    %5 = arith.addf %2, %4 : vector<8x256xf32>
    %cst_5 = arith.constant 0.000000e+00 : f32
    %6 = vector.broadcast %cst_5 : f32 to vector<8x256xf32>
    %7 = arith.maximumf %5, %6 : vector<8x256xf32>
    %8 = arith.truncf %7 : vector<8x256xf32> to vector<8x256xbf16>
    %c0_6 = arith.constant 0 : index
    %c0_7 = arith.constant 0 : index
    %9 = vector.load %arg4[%c0_6, %c0_7] : memref<256x256xbf16, #tpu.memory_space<vmem>>, vector<256x256xbf16>
    %cst_8 = arith.constant dense<0.000000e+00> : vector<8x256xf32>
    %10 = tpu.matmul %8, %9, %cst_8 {dimension_numbers = #tpu.dot_dimension_numbers<[1], [0], [0], [1], [0, 0, 1, 1], [], []>} : vector<8x256xbf16>, vector<256x256xbf16>, vector<8x256xf32> -> vector<8x256xf32>
    %c0_9 = arith.constant 0 : index
    %c0_10 = arith.constant 0 : index
    %11 = vector.load %arg5[%c0_9, %c0_10] : memref<1x256xf32, #tpu.memory_space<vmem>>, vector<1x256xf32>
    %12 = vector.broadcast %11 : vector<1x256xf32> to vector<8x256xf32>
    %13 = arith.addf %10, %12 : vector<8x256xf32>
    %cst_11 = arith.constant 0.000000e+00 : f32
    %14 = vector.broadcast %cst_11 : f32 to vector<8x256xf32>
    %15 = arith.maximumf %13, %14 : vector<8x256xf32>
    %16 = arith.truncf %15 : vector<8x256xf32> to vector<8x256xbf16>
    %c0_12 = arith.constant 0 : index
    %c0_13 = arith.constant 0 : index
    %17 = vector.load %arg6[%c0_12, %c0_13] : memref<256x256xbf16, #tpu.memory_space<vmem>>, vector<256x256xbf16>
    %cst_14 = arith.constant dense<0.000000e+00> : vector<8x256xf32>
    %18 = tpu.matmul %16, %17, %cst_14 {dimension_numbers = #tpu.dot_dimension_numbers<[1], [0], [0], [1], [0, 0, 1, 1], [], []>} : vector<8x256xbf16>, vector<256x256xbf16>, vector<8x256xf32> -> vector<8x256xf32>
    %c0_15 = arith.constant 0 : index
    %c0_16 = arith.constant 0 : index
    %19 = vector.load %arg7[%c0_15, %c0_16] : memref<1x256xf32, #tpu.memory_space<vmem>>, vector<1x256xf32>
    %20 = vector.broadcast %19 : vector<1x256xf32> to vector<8x256xf32>
    %21 = arith.addf %18, %20 : vector<8x256xf32>
    %cst_17 = arith.constant 0.000000e+00 : f32
    %22 = vector.broadcast %cst_17 : f32 to vector<8x256xf32>
    %23 = arith.maximumf %21, %22 : vector<8x256xf32>
    %24 = arith.truncf %23 : vector<8x256xf32> to vector<8x256xbf16>
    %c0_18 = arith.constant 0 : index
    %c0_19 = arith.constant 0 : index
    %25 = vector.load %arg8[%c0_18, %c0_19] : memref<256x128xbf16, #tpu.memory_space<vmem>>, vector<256x128xbf16>
    %cst_20 = arith.constant dense<0.000000e+00> : vector<8x128xf32>
    %26 = tpu.matmul %24, %25, %cst_20 {dimension_numbers = #tpu.dot_dimension_numbers<[1], [0], [0], [1], [0, 0, 1, 1], [], []>} : vector<8x256xbf16>, vector<256x128xbf16>, vector<8x128xf32> -> vector<8x128xf32>
    %c0_21 = arith.constant 0 : index
    %c0_22 = arith.constant 0 : index
    %27 = vector.load %arg9[%c0_21, %c0_22] : memref<1x128xf32, #tpu.memory_space<vmem>>, vector<1x128xf32>
    %28 = vector.broadcast %27 : vector<1x128xf32> to vector<8x128xf32>
    %29 = arith.addf %26, %28 : vector<8x128xf32>
    %c0_23 = arith.constant 0 : index
    %c0_24 = arith.constant 0 : index
    %30 = vector.load %arg10[%c0_23, %c0_24] : memref<1x128xf32, #tpu.memory_space<vmem>>, vector<1x128xf32>
    %31 = vector.broadcast %30 : vector<1x128xf32> to vector<8x128xf32>
    %32 = arith.maximumf %29, %31 : vector<8x128xf32>
    %c0_25 = arith.constant 0 : index
    %c0_26 = arith.constant 0 : index
    %33 = vector.load %arg11[%c0_25, %c0_26] : memref<1x128xf32, #tpu.memory_space<vmem>>, vector<1x128xf32>
    %34 = vector.broadcast %33 : vector<1x128xf32> to vector<8x128xf32>
    %35 = arith.minimumf %32, %34 : vector<8x128xf32>
    %36 = arith.truncf %35 : vector<8x128xf32> to vector<8x128xbf16>
    %c0_27 = arith.constant 0 : index
    %c0_28 = arith.constant 0 : index
    %37 = vector.load %arg12[%c0_27, %c0_28] : memref<8x128xbf16, #tpu.memory_space<vmem>>, vector<8x128xbf16>
    tpu.vector_store %arg12[%c0_27, %c0_28], %36 {strides = array<i32>} : memref<8x128xbf16, #tpu.memory_space<vmem>>, vector<8x128xbf16>,
    return
  }
  func.func @transform_0(%arg0: i32) -> (i32, i32) {
    %c0_i32 = arith.constant 0 : i32
    %c0_i32_0 = arith.constant 0 : i32
    return %arg0, %c0_i32 : i32, i32
  }
  func.func @transform_1(%arg0: i32) -> (i32, i32) {
    %c0_i32 = arith.constant 0 : i32
    %c0_i32_0 = arith.constant 0 : i32
    %c0_i32_1 = arith.constant 0 : i32
    return %c0_i32, %c0_i32_0 : i32, i32
  }
  func.func @transform_2(%arg0: i32) -> (i32, i32) {
    %c0_i32 = arith.constant 0 : i32
    %c0_i32_0 = arith.constant 0 : i32
    %c0_i32_1 = arith.constant 0 : i32
    return %c0_i32, %c0_i32_0 : i32, i32
  }
  func.func @transform_3(%arg0: i32) -> (i32, i32) {
    %c0_i32 = arith.constant 0 : i32
    %c0_i32_0 = arith.constant 0 : i32
    %c0_i32_1 = arith.constant 0 : i32
    return %c0_i32, %c0_i32_0 : i32, i32
  }
  func.func @transform_4(%arg0: i32) -> (i32, i32) {
    %c0_i32 = arith.constant 0 : i32
    %c0_i32_0 = arith.constant 0 : i32
    %c0_i32_1 = arith.constant 0 : i32
    return %c0_i32, %c0_i32_0 : i32, i32
  }
  func.func @transform_5(%arg0: i32) -> (i32, i32) {
    %c0_i32 = arith.constant 0 : i32
    %c0_i32_0 = arith.constant 0 : i32
    %c0_i32_1 = arith.constant 0 : i32
    return %c0_i32, %c0_i32_0 : i32, i32
  }
  func.func @transform_6(%arg0: i32) -> (i32, i32) {
    %c0_i32 = arith.constant 0 : i32
    %c0_i32_0 = arith.constant 0 : i32
    %c0_i32_1 = arith.constant 0 : i32
    return %c0_i32, %c0_i32_0 : i32, i32
  }
  func.func @transform_7(%arg0: i32) -> (i32, i32) {
    %c0_i32 = arith.constant 0 : i32
    %c0_i32_0 = arith.constant 0 : i32
    %c0_i32_1 = arith.constant 0 : i32
    return %c0_i32, %c0_i32_0 : i32, i32
  }
  func.func @transform_8(%arg0: i32) -> (i32, i32) {
    %c0_i32 = arith.constant 0 : i32
    %c0_i32_0 = arith.constant 0 : i32
    %c0_i32_1 = arith.constant 0 : i32
    return %c0_i32, %c0_i32_0 : i32, i32
  }
  func.func @transform_9(%arg0: i32) -> (i32, i32) {
    %c0_i32 = arith.constant 0 : i32
    %c0_i32_0 = arith.constant 0 : i32
    %c0_i32_1 = arith.constant 0 : i32
    return %c0_i32, %c0_i32_0 : i32, i32
  }
  func.func @transform_10(%arg0: i32) -> (i32, i32) {
    %c0_i32 = arith.constant 0 : i32
    %c0_i32_0 = arith.constant 0 : i32
    %c0_i32_1 = arith.constant 0 : i32
    return %c0_i32, %c0_i32_0 : i32, i32
  }
  func.func @transform_11(%arg0: i32) -> (i32, i32) {
    %c0_i32 = arith.constant 0 : i32
    %c0_i32_0 = arith.constant 0 : i32
    return %arg0, %c0_i32 : i32, i32
  }
}

module attributes {stable_mosaic.version = 11 : i64} {
  func.func @_policy_kernel(%arg0: i32, %arg1: memref<8x128xbf16, #tpu.memory_space<vmem>>, %arg2: memref<128x256xbf16, #tpu.memory_space<vmem>>, %arg3: memref<1x256xf32, #tpu.memory_space<vmem>>, %arg4: memref<256x256xbf16, #tpu.memory_space<vmem>>, %arg5: memref<1x256xf32, #tpu.memory_space<vmem>>, %arg6: memref<256x256xbf16, #tpu.memory_space<vmem>>, %arg7: memref<1x256xf32, #tpu.memory_space<vmem>>, %arg8: memref<256x128xbf16, #tpu.memory_space<vmem>>, %arg9: memref<1x128xf32, #tpu.memory_space<vmem>>, %arg10: memref<1x128xf32, #tpu.memory_space<vmem>>, %arg11: memref<1x128xf32, #tpu.memory_space<vmem>>, %arg12: memref<8x128xbf16, #tpu.memory_space<vmem>>) attributes {dimension_semantics = [#tpu.dimension_semantics<parallel>], iteration_bounds = array<i64: 1>, scalar_prefetch = 0 : i64, scratch_operands = 0 : i64, tpu.core_type = #tpu.core_type<tc>, window_params = [{transform_indices = @transform_0, window_bounds = array<i64: 8, 128>}, {pipeline_mode = #tpu.pipeline_mode<synchronous>, transform_indices = @transform_1, window_bounds = array<i64: 128, 256>}, {pipeline_mode = #tpu.pipeline_mode<synchronous>, transform_indices = @transform_2, window_bounds = array<i64: 1, 256>}, {pipeline_mode = #tpu.pipeline_mode<synchronous>, transform_indices = @transform_3, window_bounds = array<i64: 256, 256>}, {pipeline_mode = #tpu.pipeline_mode<synchronous>, transform_indices = @transform_4, window_bounds = array<i64: 1, 256>}, {pipeline_mode = #tpu.pipeline_mode<synchronous>, transform_indices = @transform_5, window_bounds = array<i64: 256, 256>}, {pipeline_mode = #tpu.pipeline_mode<synchronous>, transform_indices = @transform_6, window_bounds = array<i64: 1, 256>}, {pipeline_mode = #tpu.pipeline_mode<synchronous>, transform_indices = @transform_7, window_bounds = array<i64: 256, 128>}, {pipeline_mode = #tpu.pipeline_mode<synchronous>, transform_indices = @transform_8, window_bounds = array<i64: 1, 128>}, {pipeline_mode = #tpu.pipeline_mode<synchronous>, transform_indices = @transform_9, window_bounds = array<i64: 1, 128>}, {pipeline_mode = #tpu.pipeline_mode<synchronous>, transform_indices = @transform_10, window_bounds = array<i64: 1, 128>}, {transform_indices = @transform_11, window_bounds = array<i64: 8, 128>}]} {
    %c0 = arith.constant 0 : index
    %c0_0 = arith.constant 0 : index
    %0 = vector.load %arg1[%c0, %c0_0] : memref<8x128xbf16, #tpu.memory_space<vmem>>, vector<8x128xbf16>
    %c0_1 = arith.constant 0 : index
    %c0_2 = arith.constant 0 : index
    %1 = vector.load %arg2[%c0_1, %c0_2] : memref<128x256xbf16, #tpu.memory_space<vmem>>, vector<128x256xbf16>
    %cst = arith.constant dense<0.000000e+00> : vector<8x256xf32>
    %2 = tpu.matmul %0, %1, %cst {dimension_numbers = #tpu.dot_dimension_numbers<[1], [0], [0], [1], [0, 0, 1, 1], [], []>} : vector<8x128xbf16>, vector<128x256xbf16>, vector<8x256xf32> -> vector<8x256xf32>
    %c0_3 = arith.constant 0 : index
    %c0_4 = arith.constant 0 : index
    %3 = vector.load %arg3[%c0_3, %c0_4] : memref<1x256xf32, #tpu.memory_space<vmem>>, vector<1x256xf32>
    %4 = vector.broadcast %3 : vector<1x256xf32> to vector<8x256xf32>
    %5 = arith.addf %2, %4 : vector<8x256xf32>
    %cst_5 = arith.constant 0.000000e+00 : f32
    %6 = vector.broadcast %cst_5 : f32 to vector<8x256xf32>
    %7 = arith.maximumf %5, %6 : vector<8x256xf32>
    %8 = arith.truncf %7 : vector<8x256xf32> to vector<8x256xbf16>
    %c0_6 = arith.constant 0 : index
    %c0_7 = arith.constant 0 : index
    %9 = vector.load %arg4[%c0_6, %c0_7] : memref<256x256xbf16, #tpu.memory_space<vmem>>, vector<256x256xbf16>
    %cst_8 = arith.constant dense<0.000000e+00> : vector<8x256xf32>
    %10 = tpu.matmul %8, %9, %cst_8 {dimension_numbers = #tpu.dot_dimension_numbers<[1], [0], [0], [1], [0, 0, 1, 1], [], []>} : vector<8x256xbf16>, vector<256x256xbf16>, vector<8x256xf32> -> vector<8x256xf32>
    %c0_9 = arith.constant 0 : index
    %c0_10 = arith.constant 0 : index
    %11 = vector.load %arg5[%c0_9, %c0_10] : memref<1x256xf32, #tpu.memory_space<vmem>>, vector<1x256xf32>
    %12 = vector.broadcast %11 : vector<1x256xf32> to vector<8x256xf32>
    %13 = arith.addf %10, %12 : vector<8x256xf32>
    %cst_11 = arith.constant 0.000000e+00 : f32
    %14 = vector.broadcast %cst_11 : f32 to vector<8x256xf32>
    %15 = arith.maximumf %13, %14 : vector<8x256xf32>
    %16 = arith.truncf %15 : vector<8x256xf32> to vector<8x256xbf16>
    %c0_12 = arith.constant 0 : index
    %c0_13 = arith.constant 0 : index
    %17 = vector.load %arg6[%c0_12, %c0_13] : memref<256x256xbf16, #tpu.memory_space<vmem>>, vector<256x256xbf16>
    %cst_14 = arith.constant dense<0.000000e+00> : vector<8x256xf32>
    %18 = tpu.matmul %16, %17, %cst_14 {dimension_numbers = #tpu.dot_dimension_numbers<[1], [0], [0], [1], [0, 0, 1, 1], [], []>} : vector<8x256xbf16>, vector<256x256xbf16>, vector<8x256xf32> -> vector<8x256xf32>
    %c0_15 = arith.constant 0 : index
    %c0_16 = arith.constant 0 : index
    %19 = vector.load %arg7[%c0_15, %c0_16] : memref<1x256xf32, #tpu.memory_space<vmem>>, vector<1x256xf32>
    %20 = vector.broadcast %19 : vector<1x256xf32> to vector<8x256xf32>
    %21 = arith.addf %18, %20 : vector<8x256xf32>
    %cst_17 = arith.constant 0.000000e+00 : f32
    %22 = vector.broadcast %cst_17 : f32 to vector<8x256xf32>
    %23 = arith.maximumf %21, %22 : vector<8x256xf32>
    %24 = arith.truncf %23 : vector<8x256xf32> to vector<8x256xbf16>
    %c0_18 = arith.constant 0 : index
    %c0_19 = arith.constant 0 : index
    %25 = vector.load %arg8[%c0_18, %c0_19] : memref<256x128xbf16, #tpu.memory_space<vmem>>, vector<256x128xbf16>
    %cst_20 = arith.constant dense<0.000000e+00> : vector<8x128xf32>
    %26 = tpu.matmul %24, %25, %cst_20 {dimension_numbers = #tpu.dot_dimension_numbers<[1], [0], [0], [1], [0, 0, 1, 1], [], []>} : vector<8x256xbf16>, vector<256x128xbf16>, vector<8x128xf32> -> vector<8x128xf32>
    %c0_21 = arith.constant 0 : index
    %c0_22 = arith.constant 0 : index
    %27 = vector.load %arg9[%c0_21, %c0_22] : memref<1x128xf32, #tpu.memory_space<vmem>>, vector<1x128xf32>
    %28 = vector.broadcast %27 : vector<1x128xf32> to vector<8x128xf32>
    %29 = arith.addf %26, %28 : vector<8x128xf32>
    %c0_23 = arith.constant 0 : index
    %c0_24 = arith.constant 0 : index
    %30 = vector.load %arg10[%c0_23, %c0_24] : memref<1x128xf32, #tpu.memory_space<vmem>>, vector<1x128xf32>
    %31 = vector.broadcast %30 : vector<1x128xf32> to vector<8x128xf32>
    %32 = arith.maximumf %29, %31 : vector<8x128xf32>
    %c0_25 = arith.constant 0 : index
    %c0_26 = arith.constant 0 : index
    %33 = vector.load %arg11[%c0_25, %c0_26] : memref<1x128xf32, #tpu.memory_space<vmem>>, vector<1x128xf32>
    %34 = vector.broadcast %33 : vector<1x128xf32> to vector<8x128xf32>
    %35 = arith.minimumf %32, %34 : vector<8x128xf32>
    %36 = arith.truncf %35 : vector<8x128xf32> to vector<8x128xbf16>
    %c0_27 = arith.constant 0 : index
    %c0_28 = arith.constant 0 : index
    %37 = vector.load %arg12[%c0_27, %c0_28] : memref<8x128xbf16, #tpu.memory_space<vmem>>, vector<8x128xbf16>
    tpu.vector_store %arg12[%c0_27, %c0_28], %36 {strides = array<i32>} : memref<8x128xbf16, #tpu.memory_space<vmem>>, vector<8x128xbf16>,
    return
  }
  func.func @transform_0(%arg0: i32) -> (i32, i32) {
    %c0_i32 = arith.constant 0 : i32
    %c0_i32_0 = arith.constant 0 : i32
    return %arg0, %c0_i32 : i32, i32
  }
  func.func @transform_1(%arg0: i32) -> (i32, i32) {
    %c0_i32 = arith.constant 0 : i32
    %c0_i32_0 = arith.constant 0 : i32
    %c0_i32_1 = arith.constant 0 : i32
    return %c0_i32, %c0_i32_0 : i32, i32
  }
  func.func @transform_2(%arg0: i32) -> (i32, i32) {
    %c0_i32 = arith.constant 0 : i32
    %c0_i32_0 = arith.constant 0 : i32
    %c0_i32_1 = arith.constant 0 : i32
    return %c0_i32, %c0_i32_0 : i32, i32
  }
  func.func @transform_3(%arg0: i32) -> (i32, i32) {
    %c0_i32 = arith.constant 0 : i32
    %c0_i32_0 = arith.constant 0 : i32
    %c0_i32_1 = arith.constant 0 : i32
    return %c0_i32, %c0_i32_0 : i32, i32
  }
  func.func @transform_4(%arg0: i32) -> (i32, i32) {
    %c0_i32 = arith.constant 0 : i32
    %c0_i32_0 = arith.constant 0 : i32
    %c0_i32_1 = arith.constant 0 : i32
    return %c0_i32, %c0_i32_0 : i32, i32
  }
  func.func @transform_5(%arg0: i32) -> (i32, i32) {
    %c0_i32 = arith.constant 0 : i32
    %c0_i32_0 = arith.constant 0 : i32
    %c0_i32_1 = arith.constant 0 : i32
    return %c0_i32, %c0_i32_0 : i32, i32
  }
  func.func @transform_6(%arg0: i32) -> (i32, i32) {
    %c0_i32 = arith.constant 0 : i32
    %c0_i32_0 = arith.constant 0 : i32
    %c0_i32_1 = arith.constant 0 : i32
    return %c0_i32, %c0_i32_0 : i32, i32
  }
  func.func @transform_7(%arg0: i32) -> (i32, i32) {
    %c0_i32 = arith.constant 0 : i32
    %c0_i32_0 = arith.constant 0 : i32
    %c0_i32_1 = arith.constant 0 : i32
    return %c0_i32, %c0_i32_0 : i32, i32
  }
  func.func @transform_8(%arg0: i32) -> (i32, i32) {
    %c0_i32 = arith.constant 0 : i32
    %c0_i32_0 = arith.constant 0 : i32
    %c0_i32_1 = arith.constant 0 : i32
    return %c0_i32, %c0_i32_0 : i32, i32
  }
  func.func @transform_9(%arg0: i32) -> (i32, i32) {
    %c0_i32 = arith.constant 0 : i32
    %c0_i32_0 = arith.constant 0 : i32
    %c0_i32_1 = arith.constant 0 : i32
    return %c0_i32, %c0_i32_0 : i32, i32
  }
  func.func @transform_10(%arg0: i32) -> (i32, i32) {
    %c0_i32 = arith.constant 0 : i32
    %c0_i32_0 = arith.constant 0 : i32
    %c0_i32_1 = arith.constant 0 : i32
    return %c0_i32, %c0_i32_0 : i32, i32
  }
  func.func @transform_11(%arg0: i32) -> (i32, i32) {
    %c0_i32 = arith.constant 0 : i32
    %c0_i32_0 = arith.constant 0 : i32
    return %arg0, %c0_i32 : i32, i32
  }
}

</mosaic_0001>

<llo_original>
// kernel: tpu_custom_call.1
$region0: #{tpu_custom_call.1}
  #allocation0 [shape = 'u32[]', space=smem, size = 0x4, offset = 0x4, fixed_abs, tag = 'smem constant byte address 0x4 - core index']
  #allocation1 [shape = 'u32[144,128]{1,0:T(1,128)}', space=vmem, size = 0x12000, scoped, tag = 'internal scratch']
  %s0 = inlined_call_operand.hbm [shape: bf16[8,128], index: 0, kind: input, shape index: {}]
  %s1 = inlined_call_operand.hbm [shape: bf16[128,256], index: 1, kind: input, shape index: {}]
  %s2 = inlined_call_operand.vmem [shape: f32[1,256], index: 2, kind: input, shape index: {}]
  %s3 = inlined_call_operand.hbm [shape: bf16[256,256], index: 3, kind: input, shape index: {}]
  %s4 = inlined_call_operand.vmem [shape: f32[1,256], index: 4, kind: input, shape index: {}]
  %s5 = inlined_call_operand.hbm [shape: bf16[256,256], index: 5, kind: input, shape index: {}]
  %s6 = inlined_call_operand.vmem [shape: f32[1,256], index: 6, kind: input, shape index: {}]
  %s7 = inlined_call_operand.hbm [shape: bf16[256,128], index: 7, kind: input, shape index: {}]
  %s8 = inlined_call_operand.vmem [shape: f32[1,128], index: 8, kind: input, shape index: {}]
  %s9 = inlined_call_operand.vmem [shape: f32[1,128], index: 9, kind: input, shape index: {}]
  %s10 = inlined_call_operand.vmem [shape: f32[1,128], index: 10, kind: input, shape index: {}]
  %s11 = inlined_call_operand.hbm [shape: bf16[8,128], index: 11, kind: output, shape index: {}]
  %s12 = sld [smem:[#allocation0]]
  $region74: #{tpu_custom_call.1} parent=0
    _
  %s14 = ssub.s32 1, %s12
  %s15 = scalar_select 0, %s14, %s12
  $region1: #{tpu_custom_call.1} parent=0
    #allocation2 [shape = 'u8[2048]{0}', space=vmem, size = 0x800, scoped, tag = 'input window, operand 0, single buffered']
    #allocation3 [shape = 's32[1]{0}', space=sflag, size = 0x4, scoped, tag = 'scoped memory for tpu_custom_call.1']
    #allocation4 [shape = 's32[1]{0}', space=sflag, size = 0x4, scoped, tag = 'scoped memory for tpu_custom_call.1']
    #allocation5 [shape = 'u8[65536]{0}', space=vmem, size = 0x10000, scoped, tag = 'input window, operand 1, single buffered']
    #allocation6 [shape = 's32[1]{0}', space=sflag, size = 0x4, scoped, tag = 'scoped memory for tpu_custom_call.1']
    #allocation7 [shape = 'u8[131072]{0}', space=vmem, size = 0x20000, scoped, tag = 'input window, operand 3, single buffered']
    #allocation8 [shape = 'u8[131072]{0}', space=vmem, size = 0x20000, scoped, tag = 'input window, operand 5, single buffered']
    #allocation9 [shape = 's32[1]{0}', space=sflag, size = 0x4, scoped, tag = 'scoped memory for tpu_custom_call.1']
    #allocation10 [shape = 'u8[65536]{0}', space=vmem, size = 0x10000, scoped, tag = 'input window, operand 7, single buffered']
    #allocation11 [shape = 'u8[2048]{0}', space=vmem, size = 0x800, scoped, tag = 'output window, operand 0, single buffered']
    %16 = vsyncpa [#allocation3], 0
    %17 = vsyncpa [#allocation6], 0
    %18 = vsyncpa [#allocation9], 0
    %19 = vsyncpa [#allocation4], 0
    // Predicated region
    $region2: #{tpu_custom_call.1} parent=1 // pred_check
      _
    $region3: #{tpu_custom_call.1} parent=1 // pred_check_branch
      %21 = sbr.rel (0) target = $region5
    $region4: #{tpu_custom_call.1} parent=1 // pred_region
      %s23 = ssub.s32 64, 64
      %24 = vsyncadd [#allocation3], %s23
      %s26 = sshll.u32 [#allocation2], 4
      %s27 = int_to_ptr.vmem [resolvable:$true] %s26
      %29 = dma.hbm_to_vmem [thread:$0]  %s0, 64, %s27, [#allocation3]
    $region5: #{tpu_custom_call.1} parent=1 // pred_fallthru
      _
    // Predicated region
    $region6: #{tpu_custom_call.1} parent=1 // pred_check
      _
    $region7: #{tpu_custom_call.1} parent=1 // pred_check_branch
      %31 = sbr.rel (0) target = $region9
    $region8: #{tpu_custom_call.1} parent=1 // pred_region
      %s33 = ssub.s32 2048, 2048
      %34 = vsyncadd [#allocation6], %s33
      %s35 = sshll.u32 [#allocation5], 4
      %s36 = int_to_ptr.vmem [resolvable:$true] %s35
      %41 = dma.hbm_to_vmem [thread:$0]  %s1, 2048, %s36, [#allocation6], 128, 128, 8
    $region9: #{tpu_custom_call.1} parent=1 // pred_fallthru
      _
    // Predicated region
    $region10: #{tpu_custom_call.1} parent=1 // pred_check
      _
    $region11: #{tpu_custom_call.1} parent=1 // pred_check_branch
      %43 = sbr.rel (0) target = $region13
    $region12: #{tpu_custom_call.1} parent=1 // pred_region
      _
    $region13: #{tpu_custom_call.1} parent=1 // pred_fallthru
      _
    // Predicated region
    $region14: #{tpu_custom_call.1} parent=1 // pred_check
      _
    $region15: #{tpu_custom_call.1} parent=1 // pred_check_branch
      %45 = sbr.rel (0) target = $region17
    $region16: #{tpu_custom_call.1} parent=1 // pred_region
      %s47 = ssub.s32 4096, 4096
      %48 = vsyncadd [#allocation6], %s47
      %s49 = sshll.u32 [#allocation7], 4
      %s50 = int_to_ptr.vmem [resolvable:$true] %s49
      %55 = dma.hbm_to_vmem [thread:$0]  %s3, 4096, %s50, [#allocation6], 128, 128, 8
    $region17: #{tpu_custom_call.1} parent=1 // pred_fallthru
      _
    // Predicated region
    $region18: #{tpu_custom_call.1} parent=1 // pred_check
      _
    $region19: #{tpu_custom_call.1} parent=1 // pred_check_branch
      %57 = sbr.rel (0) target = $region21
    $region20: #{tpu_custom_call.1} parent=1 // pred_region
      _
    $region21: #{tpu_custom_call.1} parent=1 // pred_fallthru
      _
    // Predicated region
    $region22: #{tpu_custom_call.1} parent=1 // pred_check
      _
    $region23: #{tpu_custom_call.1} parent=1 // pred_check_branch
      %59 = sbr.rel (0) target = $region25
    $region24: #{tpu_custom_call.1} parent=1 // pred_region
      %s61 = ssub.s32 4096, 4096
      %62 = vsyncadd [#allocation9], %s61
      %s63 = sshll.u32 [#allocation8], 4
      %s64 = int_to_ptr.vmem [resolvable:$true] %s63
      %69 = dma.hbm_to_vmem [thread:$0]  %s5, 4096, %s64, [#allocation9], 128, 128, 8
    $region25: #{tpu_custom_call.1} parent=1 // pred_fallthru
      _
    // Predicated region
    $region26: #{tpu_custom_call.1} parent=1 // pred_check
      _
    $region27: #{tpu_custom_call.1} parent=1 // pred_check_branch
      %71 = sbr.rel (0) target = $region29
    $region28: #{tpu_custom_call.1} parent=1 // pred_region
      _
    $region29: #{tpu_custom_call.1} parent=1 // pred_fallthru
      _
    // Predicated region
    $region30: #{tpu_custom_call.1} parent=1 // pred_check
      _
    $region31: #{tpu_custom_call.1} parent=1 // pred_check_branch
      %73 = sbr.rel (0) target = $region33
    $region32: #{tpu_custom_call.1} parent=1 // pred_region
      %s75 = ssub.s32 2048, 2048
      %76 = vsyncadd [#allocation9], %s75
      %s77 = sshll.u32 [#allocation10], 4
      %s78 = int_to_ptr.vmem [resolvable:$true] %s77
      %83 = dma.hbm_to_vmem [thread:$0]  %s7, 2048, %s78, [#allocation9], 64, 64, 4
    $region33: #{tpu_custom_call.1} parent=1 // pred_fallthru
      _
    // Predicated region
    $region34: #{tpu_custom_call.1} parent=1 // pred_check
      _
    $region35: #{tpu_custom_call.1} parent=1 // pred_check_branch
      %85 = sbr.rel (0) target = $region37
    $region36: #{tpu_custom_call.1} parent=1 // pred_region
      _
    $region37: #{tpu_custom_call.1} parent=1 // pred_fallthru
      _
    // Predicated region
    $region38: #{tpu_custom_call.1} parent=1 // pred_check
      _
    $region39: #{tpu_custom_call.1} parent=1 // pred_check_branch
      %87 = sbr.rel (0) target = $region41
    $region40: #{tpu_custom_call.1} parent=1 // pred_region
      _
    $region41: #{tpu_custom_call.1} parent=1 // pred_fallthru
      _
    // Predicated region
    $region42: #{tpu_custom_call.1} parent=1 // pred_check
      _
    $region43: #{tpu_custom_call.1} parent=1 // pred_check_branch
      %89 = sbr.rel (0) target = $region45
    $region44: #{tpu_custom_call.1} parent=1 // pred_region
      _
    $region45: #{tpu_custom_call.1} parent=1 // pred_fallthru
      _
    // Predicated region
    $region46: #{tpu_custom_call.1} parent=1 // pred_check
      _
    $region47: #{tpu_custom_call.1} parent=1 // pred_check_branch
      %91 = sbr.rel (0) target = $region49
    $region48: #{tpu_custom_call.1} parent=1 // pred_region
      %92 = dma.done [#allocation3], 64
    $region49: #{tpu_custom_call.1} parent=1 // pred_fallthru
      _
    // Predicated region
    $region50: #{tpu_custom_call.1} parent=1 // pred_check
      _
    $region51: #{tpu_custom_call.1} parent=1 // pred_check_branch
      %94 = sbr.rel (0) target = $region53
    $region52: #{tpu_custom_call.1} parent=1 // pred_region
      %95 = dma.done [#allocation6], 2048
    $region53: #{tpu_custom_call.1} parent=1 // pred_fallthru
      _
    // Predicated region
    $region54: #{tpu_custom_call.1} parent=1 // pred_check
      _
    $region55: #{tpu_custom_call.1} parent=1 // pred_check_branch
      %97 = sbr.rel (0) target = $region57
    $region56: #{tpu_custom_call.1} parent=1 // pred_region
      %98 = dma.done [#allocation6], 4096
    $region57: #{tpu_custom_call.1} parent=1 // pred_fallthru
      _
    // Predicated region
    $region58: #{tpu_custom_call.1} parent=1 // pred_check
      _
    $region59: #{tpu_custom_call.1} parent=1 // pred_check_branch
      %100 = sbr.rel (0) target = $region61
    $region60: #{tpu_custom_call.1} parent=1 // pred_region
      %101 = dma.done [#allocation9], 4096
    $region61: #{tpu_custom_call.1} parent=1 // pred_fallthru
      _
    // Predicated region
    $region62: #{tpu_custom_call.1} parent=1 // pred_check
      _
    $region63: #{tpu_custom_call.1} parent=1 // pred_check_branch
      %103 = sbr.rel (0) target = $region65
    $region64: #{tpu_custom_call.1} parent=1 // pred_region
      %104 = dma.done [#allocation9], 2048
    $region65: #{tpu_custom_call.1} parent=1 // pred_fallthru
      _
    %v106 = vld [vmem:[#allocation2] sm:$0xf]
    %v107 = vld [vmem:[#allocation5] sm:$0xff]
    %v108 = vld [vmem:[#allocation5 + $0x8] sm:$0xff]
    %v109 = vld [vmem:[#allocation5 + $0x10] sm:$0xff]
    %v110 = vld [vmem:[#allocation5 + $0x18] sm:$0xff]
    %v111 = vld [vmem:[#allocation5 + $0x20] sm:$0xff]
    %v112 = vld [vmem:[#allocation5 + $0x28] sm:$0xff]
    %v113 = vld [vmem:[#allocation5 + $0x30] sm:$0xff]
    %v114 = vld [vmem:[#allocation5 + $0x38] sm:$0xff]
    %v115 = vld [vmem:[#allocation5 + $0x40] sm:$0xff]
    %v116 = vld [vmem:[#allocation5 + $0x48] sm:$0xff]
    %v117 = vld [vmem:[#allocation5 + $0x50] sm:$0xff]
    %v118 = vld [vmem:[#allocation5 + $0x58] sm:$0xff]
    %v119 = vld [vmem:[#allocation5 + $0x60] sm:$0xff]
    %v120 = vld [vmem:[#allocation5 + $0x68] sm:$0xff]
    %v121 = vld [vmem:[#allocation5 + $0x70] sm:$0xff]
    %v122 = vld [vmem:[#allocation5 + $0x78] sm:$0xff]
    %v123 = vld [vmem:[%s2] sm:$0x3]
    %v125 = vlaneseq
    %v126 = vshrl.u32 %v125, 7
    %v127 = vsub.s32 0, %v126
    %v128 = vrot.slane %v123, %v127
    %v129 = vlaneseq
    %v130 = vshrl.u32 %v129, 7
    %v131 = vsub.s32 1, %v130
    %v132 = vrot.slane %v123, %v131
    %v151 = vunpack.c.l.b16 %v107
    %v152 = vunpack.c.h.b16 %v107
    %v153 = vunpack.c.l.b16 %v108
    %v154 = vunpack.c.h.b16 %v108
    %v155 = vunpack.c.l.b16 %v109
    %v156 = vunpack.c.h.b16 %v109
    %v157 = vunpack.c.l.b16 %v110
    %v158 = vunpack.c.h.b16 %v110
    %v159 = vunpack.c.l.b16 %v111
    %v160 = vunpack.c.h.b16 %v111
    %v161 = vunpack.c.l.b16 %v112
    %v162 = vunpack.c.h.b16 %v112
    %v163 = vunpack.c.l.b16 %v113
    %v164 = vunpack.c.h.b16 %v113
    %v165 = vunpack.c.l.b16 %v114
    %v166 = vunpack.c.h.b16 %v114
    %v167 = vunpack.c.l.b16 %v115
    %v168 = vunpack.c.h.b16 %v115
    %v169 = vunpack.c.l.b16 %v116
    %v170 = vunpack.c.h.b16 %v116
    %v171 = vunpack.c.l.b16 %v117
    %v172 = vunpack.c.h.b16 %v117
    %v173 = vunpack.c.l.b16 %v118
    %v174 = vunpack.c.h.b16 %v118
    %v175 = vunpack.c.l.b16 %v119
    %v176 = vunpack.c.h.b16 %v119
    %v177 = vunpack.c.l.b16 %v120
    %v178 = vunpack.c.h.b16 %v120
    %v179 = vunpack.c.l.b16 %v121
    %v180 = vunpack.c.h.b16 %v121
    %v181 = vunpack.c.l.b16 %v122
    %v182 = vunpack.c.h.b16 %v122
    %v183 = vpack.c.b16 %v153, %v151
    %v184 = vpack.c.b16 %v154, %v152
    %v185 = vpack.c.b16 %v157, %v155
    %v186 = vpack.c.b16 %v158, %v156
    %v187 = vpack.c.b16 %v161, %v159
    %v188 = vpack.c.b16 %v162, %v160
    %v189 = vpack.c.b16 %v165, %v163
    %v190 = vpack.c.b16 %v166, %v164
    %v191 = vpack.c.b16 %v169, %v167
    %v192 = vpack.c.b16 %v170, %v168
    %v193 = vpack.c.b16 %v173, %v171
    %v194 = vpack.c.b16 %v174, %v172
    %v195 = vpack.c.b16 %v177, %v175
    %v196 = vpack.c.b16 %v178, %v176
    %v197 = vpack.c.b16 %v181, %v179
    %v198 = vpack.c.b16 %v182, %v180
    %215 = vmatprep.subr.bf16.mxu0 %v184
    %216 = vmatpush1.bf16.msra.mxu0 %v183
    %217 = vmatprep.subr.bf16.mxu0 %v186
    %218 = vmatpush1.bf16.msra.mxu0 %v185
    %219 = vmatprep.subr.bf16.mxu0 %v188
    %220 = vmatpush1.bf16.msra.mxu0 %v187
    %221 = vmatprep.subr.bf16.mxu0 %v190
    %222 = vmatpush1.bf16.msra.mxu0 %v189
    %223 = vmatprep.subr.bf16.mxu0 %v192
    %224 = vmatpush1.bf16.msra.mxu0 %v191
    %225 = vmatprep.subr.bf16.mxu0 %v194
    %226 = vmatpush1.bf16.msra.mxu0 %v193
    %227 = vmatprep.subr.bf16.mxu0 %v196
    %228 = vmatpush1.bf16.msra.mxu0 %v195
    %229 = vmatprep.subr.bf16.mxu0 %v198
    %230 = vmatpush1.bf16.msra.mxu0 %v197
    %231 = vmatprep.subr.bf16.mxu0 0
    %232 = vmatpush1.bf16.msra.mxu0 0
    %233 = vmatprep.subr.bf16.mxu0 0
    %234 = vmatpush1.bf16.msra.mxu0 0
    %235 = vmatprep.subr.bf16.mxu0 0
    %236 = vmatpush1.bf16.msra.mxu0 0
    %237 = vmatprep.subr.bf16.mxu0 0
    %238 = vmatpush1.bf16.msra.mxu0 0
    %239 = vmatprep.subr.bf16.mxu0 0
    %240 = vmatpush1.bf16.msra.mxu0 0
    %241 = vmatprep.subr.bf16.mxu0 0
    %242 = vmatpush1.bf16.msra.mxu0 0
    %243 = vmatprep.subr.bf16.mxu0 0
    %244 = vmatpush1.bf16.msra.mxu0 0
    %245 = vmatprep.subr.bf16.mxu0 0
    %246 = vmatpush1.bf16.msra.mxu0 0
    %247 = vmatprep.mubr.bf16.mxu0 0
    %248 = vmatmul.mubr.bf16.gmra.mrb[0].mxu0 %v106
    %v249 = vpop.f32.mrb[0].mxu0
    %v250 = vadd.f32 %v128, %v249
    %v251 = vpop.f32.mrb[0].mxu0
    %v252 = vadd.f32 %v132, %v251
    %v253 = vpop.f32.mrb[0].mxu0
    %v254 = vpop.f32.mrb[0].mxu0
    %255 = vdwg.mxu0
    %v256 = vmax.f32 %v250, 0.0
    %v257 = vmax.f32 %v252, 0.0
    %v258 = vpack.c.bf16 %v256, %v256
    %v259 = vpack.c.bf16 %v257, %v257
    %v260 = vld [vmem:[#allocation7] sm:$0xff]
    %v261 = vld [vmem:[#allocation7 + $0x8] sm:$0xff]
    %v262 = vld [vmem:[#allocation7 + $0x10] sm:$0xff]
    %v263 = vld [vmem:[#allocation7 + $0x18] sm:$0xff]
    %v264 = vld [vmem:[#allocation7 + $0x20] sm:$0xff]
    %v265 = vld [vmem:[#allocation7 + $0x28] sm:$0xff]
    %v266 = vld [vmem:[#allocation7 + $0x30] sm:$0xff]
    %v267 = vld [vmem:[#allocation7 + $0x38] sm:$0xff]
    %v268 = vld [vmem:[#allocation7 + $0x40] sm:$0xff]
    %v269 = vld [vmem:[#allocation7 + $0x48] sm:$0xff]
    %v270 = vld [vmem:[#allocation7 + $0x50] sm:$0xff]
    %v271 = vld [vmem:[#allocation7 + $0x58] sm:$0xff]
    %v272 = vld [vmem:[#allocation7 + $0x60] sm:$0xff]
    %v273 = vld [vmem:[#allocation7 + $0x68] sm:$0xff]
    %v274 = vld [vmem:[#allocation7 + $0x70] sm:$0xff]
    %v275 = vld [vmem:[#allocation7 + $0x78] sm:$0xff]
    %v276 = vld [vmem:[#allocation7 + $0x80] sm:$0xff]
    %v277 = vld [vmem:[#allocation7 + $0x88] sm:$0xff]
    %v278 = vld [vmem:[#allocation7 + $0x90] sm:$0xff]
    %v279 = vld [vmem:[#allocation7 + $0x98] sm:$0xff]
    %v280 = vld [vmem:[#allocation7 + $0xa0] sm:$0xff]
    %v281 = vld [vmem:[#allocation7 + $0xa8] sm:$0xff]
    %v282 = vld [vmem:[#allocation7 + $0xb0] sm:$0xff]
    %v283 = vld [vmem:[#allocation7 + $0xb8] sm:$0xff]
    %v284 = vld [vmem:[#allocation7 + $0xc0] sm:$0xff]
    %v285 = vld [vmem:[#allocation7 + $0xc8] sm:$0xff]
    %v286 = vld [vmem:[#allocation7 + $0xd0] sm:$0xff]
    %v287 = vld [vmem:[#allocation7 + $0xd8] sm:$0xff]
    %v288 = vld [vmem:[#allocation7 + $0xe0] sm:$0xff]
    %v289 = vld [vmem:[#allocation7 + $0xe8] sm:$0xff]
    %v290 = vld [vmem:[#allocation7 + $0xf0] sm:$0xff]
    %v291 = vld [vmem:[#allocation7 + $0xf8] sm:$0xff]
    %v292 = vld [vmem:[%s4] sm:$0x3]
    %v294 = vlaneseq
    %v295 = vshrl.u32 %v294, 7
    %v296 = vsub.s32 0, %v295
    %v297 = vrot.slane %v292, %v296
    %v298 = vlaneseq
    %v299 = vshrl.u32 %v298, 7
    %v300 = vsub.s32 1, %v299
    %v301 = vrot.slane %v292, %v300
    %v336 = vunpack.c.l.b16 %v260
    %v337 = vunpack.c.h.b16 %v260
    %v338 = vunpack.c.l.b16 %v261
    %v339 = vunpack.c.h.b16 %v261
    %v340 = vunpack.c.l.b16 %v262
    %v341 = vunpack.c.h.b16 %v262
    %v342 = vunpack.c.l.b16 %v263
    %v343 = vunpack.c.h.b16 %v263
    %v344 = vunpack.c.l.b16 %v264
    %v345 = vunpack.c.h.b16 %v264
    %v346 = vunpack.c.l.b16 %v265
    %v347 = vunpack.c.h.b16 %v265
    %v348 = vunpack.c.l.b16 %v266
    %v349 = vunpack.c.h.b16 %v266
    %v350 = vunpack.c.l.b16 %v267
    %v351 = vunpack.c.h.b16 %v267
    %v352 = vunpack.c.l.b16 %v268
    %v353 = vunpack.c.h.b16 %v268
    %v354 = vunpack.c.l.b16 %v269
    %v355 = vunpack.c.h.b16 %v269
    %v356 = vunpack.c.l.b16 %v270
    %v357 = vunpack.c.h.b16 %v270
    %v358 = vunpack.c.l.b16 %v271
    %v359 = vunpack.c.h.b16 %v271
    %v360 = vunpack.c.l.b16 %v272
    %v361 = vunpack.c.h.b16 %v272
    %v362 = vunpack.c.l.b16 %v273
    %v363 = vunpack.c.h.b16 %v273
    %v364 = vunpack.c.l.b16 %v274
    %v365 = vunpack.c.h.b16 %v274
    %v366 = vunpack.c.l.b16 %v275
    %v367 = vunpack.c.h.b16 %v275
    %v368 = vunpack.c.l.b16 %v276
    %v369 = vunpack.c.h.b16 %v276
    %v370 = vunpack.c.l.b16 %v277
    %v371 = vunpack.c.h.b16 %v277
    %v372 = vunpack.c.l.b16 %v278
    %v373 = vunpack.c.h.b16 %v278
    %v374 = vunpack.c.l.b16 %v279
    %v375 = vunpack.c.h.b16 %v279
    %v376 = vunpack.c.l.b16 %v280
    %v377 = vunpack.c.h.b16 %v280
    %v378 = vunpack.c.l.b16 %v281
    %v379 = vunpack.c.h.b16 %v281
    %v380 = vunpack.c.l.b16 %v282
    %v381 = vunpack.c.h.b16 %v282
    %v382 = vunpack.c.l.b16 %v283
    %v383 = vunpack.c.h.b16 %v283
    %v384 = vunpack.c.l.b16 %v284
    %v385 = vunpack.c.h.b16 %v284
    %v386 = vunpack.c.l.b16 %v285
    %v387 = vunpack.c.h.b16 %v285
    %v388 = vunpack.c.l.b16 %v286
    %v389 = vunpack.c.h.b16 %v286
    %v390 = vunpack.c.l.b16 %v287
    %v391 = vunpack.c.h.b16 %v287
    %v392 = vunpack.c.l.b16 %v288
    %v393 = vunpack.c.h.b16 %v288
    %v394 = vunpack.c.l.b16 %v289
    %v395 = vunpack.c.h.b16 %v289
    %v396 = vunpack.c.l.b16 %v290
    %v397 = vunpack.c.h.b16 %v290
    %v398 = vunpack.c.l.b16 %v291
    %v399 = vunpack.c.h.b16 %v291
    %v400 = vpack.c.b16 %v338, %v336
    %v401 = vpack.c.b16 %v339, %v337
    %v402 = vpack.c.b16 %v342, %v340
    %v403 = vpack.c.b16 %v343, %v341
    %v404 = vpack.c.b16 %v346, %v344
    %v405 = vpack.c.b16 %v347, %v345
    %v406 = vpack.c.b16 %v350, %v348
    %v407 = vpack.c.b16 %v351, %v349
    %v408 = vpack.c.b16 %v354, %v352
    %v409 = vpack.c.b16 %v355, %v353
    %v410 = vpack.c.b16 %v358, %v356
    %v411 = vpack.c.b16 %v359, %v357
    %v412 = vpack.c.b16 %v362, %v360
    %v413 = vpack.c.b16 %v363, %v361
    %v414 = vpack.c.b16 %v366, %v364
    %v415 = vpack.c.b16 %v367, %v365
    %v416 = vpack.c.b16 %v370, %v368
    %v417 = vpack.c.b16 %v371, %v369
    %v418 = vpack.c.b16 %v374, %v372
    %v419 = vpack.c.b16 %v375, %v373
    %v420 = vpack.c.b16 %v378, %v376
    %v421 = vpack.c.b16 %v379, %v377
    %v422 = vpack.c.b16 %v382, %v380
    %v423 = vpack.c.b16 %v383, %v381
    %v424 = vpack.c.b16 %v386, %v384
    %v425 = vpack.c.b16 %v387, %v385
    %v426 = vpack.c.b16 %v390, %v388
    %v427 = vpack.c.b16 %v391, %v389
    %v428 = vpack.c.b16 %v394, %v392
    %v429 = vpack.c.b16 %v395, %v393
    %v430 = vpack.c.b16 %v398, %v396
    %v431 = vpack.c.b16 %v399, %v397
    %464 = vmatprep.subr.bf16.mxu0 %v401
    %465 = vmatpush1.bf16.msra.mxu0 %v400
    %466 = vmatprep.subr.bf16.mxu0 %v403
    %467 = vmatpush1.bf16.msra.mxu0 %v402
    %468 = vmatprep.subr.bf16.mxu0 %v405
    %469 = vmatpush1.bf16.msra.mxu0 %v404
    %470 = vmatprep.subr.bf16.mxu0 %v407
    %471 = vmatpush1.bf16.msra.mxu0 %v406
    %472 = vmatprep.subr.bf16.mxu0 %v409
    %473 = vmatpush1.bf16.msra.mxu0 %v408
    %474 = vmatprep.subr.bf16.mxu0 %v411
    %475 = vmatpush1.bf16.msra.mxu0 %v410
    %476 = vmatprep.subr.bf16.mxu0 %v413
    %477 = vmatpush1.bf16.msra.mxu0 %v412
    %478 = vmatprep.subr.bf16.mxu0 %v415
    %479 = vmatpush1.bf16.msra.mxu0 %v414
    %480 = vmatprep.subr.bf16.mxu0 %v417
    %481 = vmatpush1.bf16.msra.mxu0 %v416
    %482 = vmatprep.subr.bf16.mxu0 %v419
    %483 = vmatpush1.bf16.msra.mxu0 %v418
    %484 = vmatprep.subr.bf16.mxu0 %v421
    %485 = vmatpush1.bf16.msra.mxu0 %v420
    %486 = vmatprep.subr.bf16.mxu0 %v423
    %487 = vmatpush1.bf16.msra.mxu0 %v422
    %488 = vmatprep.subr.bf16.mxu0 %v425
    %489 = vmatpush1.bf16.msra.mxu0 %v424
    %490 = vmatprep.subr.bf16.mxu0 %v427
    %491 = vmatpush1.bf16.msra.mxu0 %v426
    %492 = vmatprep.subr.bf16.mxu0 %v429
    %493 = vmatpush1.bf16.msra.mxu0 %v428
    %494 = vmatprep.subr.bf16.mxu0 %v431
    %495 = vmatpush1.bf16.msra.mxu0 %v430
    %496 = vmatprep.mubr.bf16.mxu0 %v259
    %497 = vmatmul.mubr.bf16.gmra.mrb[0].mxu0 %v258
    %v498 = vpop.f32.mrb[0].mxu0
    %v499 = vadd.f32 %v297, %v498
    %v500 = vpop.f32.mrb[0].mxu0
    %v501 = vadd.f32 %v301, %v500
    %v502 = vpop.f32.mrb[0].mxu0
    %v503 = vpop.f32.mrb[0].mxu0
    %504 = vdwg.mxu0
    %v505 = vmax.f32 %v499, 0.0
    %v506 = vmax.f32 %v501, 0.0
    %v507 = vpack.c.bf16 %v505, %v505
    %v508 = vpack.c.bf16 %v506, %v506
    %v509 = vld [vmem:[#allocation8] sm:$0xff]
    %v510 = vld [vmem:[#allocation8 + $0x8] sm:$0xff]
    %v511 = vld [vmem:[#allocation8 + $0x10] sm:$0xff]
    %v512 = vld [vmem:[#allocation8 + $0x18] sm:$0xff]
    %v513 = vld [vmem:[#allocation8 + $0x20] sm:$0xff]
    %v514 = vld [vmem:[#allocation8 + $0x28] sm:$0xff]
    %v515 = vld [vmem:[#allocation8 + $0x30] sm:$0xff]
    %v516 = vld [vmem:[#allocation8 + $0x38] sm:$0xff]
    %v517 = vld [vmem:[#allocation8 + $0x40] sm:$0xff]
    %v518 = vld [vmem:[#allocation8 + $0x48] sm:$0xff]
    %v519 = vld [vmem:[#allocation8 + $0x50] sm:$0xff]
    %v520 = vld [vmem:[#allocation8 + $0x58] sm:$0xff]
    %v521 = vld [vmem:[#allocation8 + $0x60] sm:$0xff]
    %v522 = vld [vmem:[#allocation8 + $0x68] sm:$0xff]
    %v523 = vld [vmem:[#allocation8 + $0x70] sm:$0xff]
    %v524 = vld [vmem:[#allocation8 + $0x78] sm:$0xff]
    %v525 = vld [vmem:[#allocation8 + $0x80] sm:$0xff]
    %v526 = vld [vmem:[#allocation8 + $0x88] sm:$0xff]
    %v527 = vld [vmem:[#allocation8 + $0x90] sm:$0xff]
    %v528 = vld [vmem:[#allocation8 + $0x98] sm:$0xff]
    %v529 = vld [vmem:[#allocation8 + $0xa0] sm:$0xff]
    %v530 = vld [vmem:[#allocation8 + $0xa8] sm:$0xff]
    %v531 = vld [vmem:[#allocation8 + $0xb0] sm:$0xff]
    %v532 = vld [vmem:[#allocation8 + $0xb8] sm:$0xff]
    %v533 = vld [vmem:[#allocation8 + $0xc0] sm:$0xff]
    %v534 = vld [vmem:[#allocation8 + $0xc8] sm:$0xff]
    %v535 = vld [vmem:[#allocation8 + $0xd0] sm:$0xff]
    %v536 = vld [vmem:[#allocation8 + $0xd8] sm:$0xff]
    %v537 = vld [vmem:[#allocation8 + $0xe0] sm:$0xff]
    %v538 = vld [vmem:[#allocation8 + $0xe8] sm:$0xff]
    %v539 = vld [vmem:[#allocation8 + $0xf0] sm:$0xff]
    %v540 = vld [vmem:[#allocation8 + $0xf8] sm:$0xff]
    %v541 = vld [vmem:[%s6] sm:$0x3]
    %v543 = vlaneseq
    %v544 = vshrl.u32 %v543, 7
    %v545 = vsub.s32 0, %v544
    %v546 = vrot.slane %v541, %v545
    %v547 = vlaneseq
    %v548 = vshrl.u32 %v547, 7
    %v549 = vsub.s32 1, %v548
    %v550 = vrot.slane %v541, %v549
    %v585 = vunpack.c.l.b16 %v509
    %v586 = vunpack.c.h.b16 %v509
    %v587 = vunpack.c.l.b16 %v510
    %v588 = vunpack.c.h.b16 %v510
    %v589 = vunpack.c.l.b16 %v511
    %v590 = vunpack.c.h.b16 %v511
    %v591 = vunpack.c.l.b16 %v512
    %v592 = vunpack.c.h.b16 %v512
    %v593 = vunpack.c.l.b16 %v513
    %v594 = vunpack.c.h.b16 %v513
    %v595 = vunpack.c.l.b16 %v514
    %v596 = vunpack.c.h.b16 %v514
    %v597 = vunpack.c.l.b16 %v515
    %v598 = vunpack.c.h.b16 %v515
    %v599 = vunpack.c.l.b16 %v516
    %v600 = vunpack.c.h.b16 %v516
    %v601 = vunpack.c.l.b16 %v517
    %v602 = vunpack.c.h.b16 %v517
    %v603 = vunpack.c.l.b16 %v518
    %v604 = vunpack.c.h.b16 %v518
    %v605 = vunpack.c.l.b16 %v519
    %v606 = vunpack.c.h.b16 %v519
    %v607 = vunpack.c.l.b16 %v520
    %v608 = vunpack.c.h.b16 %v520
    %v609 = vunpack.c.l.b16 %v521
    %v610 = vunpack.c.h.b16 %v521
    %v611 = vunpack.c.l.b16 %v522
    %v612 = vunpack.c.h.b16 %v522
    %v613 = vunpack.c.l.b16 %v523
    %v614 = vunpack.c.h.b16 %v523
    %v615 = vunpack.c.l.b16 %v524
    %v616 = vunpack.c.h.b16 %v524
    %v617 = vunpack.c.l.b16 %v525
    %v618 = vunpack.c.h.b16 %v525
    %v619 = vunpack.c.l.b16 %v526
    %v620 = vunpack.c.h.b16 %v526
    %v621 = vunpack.c.l.b16 %v527
    %v622 = vunpack.c.h.b16 %v527
    %v623 = vunpack.c.l.b16 %v528
    %v624 = vunpack.c.h.b16 %v528
    %v625 = vunpack.c.l.b16 %v529
    %v626 = vunpack.c.h.b16 %v529
    %v627 = vunpack.c.l.b16 %v530
    %v628 = vunpack.c.h.b16 %v530
    %v629 = vunpack.c.l.b16 %v531
    %v630 = vunpack.c.h.b16 %v531
    %v631 = vunpack.c.l.b16 %v532
    %v632 = vunpack.c.h.b16 %v532
    %v633 = vunpack.c.l.b16 %v533
    %v634 = vunpack.c.h.b16 %v533
    %v635 = vunpack.c.l.b16 %v534
    %v636 = vunpack.c.h.b16 %v534
    %v637 = vunpack.c.l.b16 %v535
    %v638 = vunpack.c.h.b16 %v535
    %v639 = vunpack.c.l.b16 %v536
    %v640 = vunpack.c.h.b16 %v536
    %v641 = vunpack.c.l.b16 %v537
    %v642 = vunpack.c.h.b16 %v537
    %v643 = vunpack.c.l.b16 %v538
    %v644 = vunpack.c.h.b16 %v538
    %v645 = vunpack.c.l.b16 %v539
    %v646 = vunpack.c.h.b16 %v539
    %v647 = vunpack.c.l.b16 %v540
    %v648 = vunpack.c.h.b16 %v540
    %v649 = vpack.c.b16 %v587, %v585
    %v650 = vpack.c.b16 %v588, %v586
    %v651 = vpack.c.b16 %v591, %v589
    %v652 = vpack.c.b16 %v592, %v590
    %v653 = vpack.c.b16 %v595, %v593
    %v654 = vpack.c.b16 %v596, %v594
    %v655 = vpack.c.b16 %v599, %v597
    %v656 = vpack.c.b16 %v600, %v598
    %v657 = vpack.c.b16 %v603, %v601
    %v658 = vpack.c.b16 %v604, %v602
    %v659 = vpack.c.b16 %v607, %v605
    %v660 = vpack.c.b16 %v608, %v606
    %v661 = vpack.c.b16 %v611, %v609
    %v662 = vpack.c.b16 %v612, %v610
    %v663 = vpack.c.b16 %v615, %v613
    %v664 = vpack.c.b16 %v616, %v614
    %v665 = vpack.c.b16 %v619, %v617
    %v666 = vpack.c.b16 %v620, %v618
    %v667 = vpack.c.b16 %v623, %v621
    %v668 = vpack.c.b16 %v624, %v622
    %v669 = vpack.c.b16 %v627, %v625
    %v670 = vpack.c.b16 %v628, %v626
    %v671 = vpack.c.b16 %v631, %v629
    %v672 = vpack.c.b16 %v632, %v630
    %v673 = vpack.c.b16 %v635, %v633
    %v674 = vpack.c.b16 %v636, %v634
    %v675 = vpack.c.b16 %v639, %v637
    %v676 = vpack.c.b16 %v640, %v638
    %v677 = vpack.c.b16 %v643, %v641
    %v678 = vpack.c.b16 %v644, %v642
    %v679 = vpack.c.b16 %v647, %v645
    %v680 = vpack.c.b16 %v648, %v646
    %713 = vmatprep.subr.bf16.mxu0 %v650
    %714 = vmatpush1.bf16.msra.mxu0 %v649
    %715 = vmatprep.subr.bf16.mxu0 %v652
    %716 = vmatpush1.bf16.msra.mxu0 %v651
    %717 = vmatprep.subr.bf16.mxu0 %v654
    %718 = vmatpush1.bf16.msra.mxu0 %v653
    %719 = vmatprep.subr.bf16.mxu0 %v656
    %720 = vmatpush1.bf16.msra.mxu0 %v655
    %721 = vmatprep.subr.bf16.mxu0 %v658
    %722 = vmatpush1.bf16.msra.mxu0 %v657
    %723 = vmatprep.subr.bf16.mxu0 %v660
    %724 = vmatpush1.bf16.msra.mxu0 %v659
    %725 = vmatprep.subr.bf16.mxu0 %v662
    %726 = vmatpush1.bf16.msra.mxu0 %v661
    %727 = vmatprep.subr.bf16.mxu0 %v664
    %728 = vmatpush1.bf16.msra.mxu0 %v663
    %729 = vmatprep.subr.bf16.mxu0 %v666
    %730 = vmatpush1.bf16.msra.mxu0 %v665
    %731 = vmatprep.subr.bf16.mxu0 %v668
    %732 = vmatpush1.bf16.msra.mxu0 %v667
    %733 = vmatprep.subr.bf16.mxu0 %v670
    %734 = vmatpush1.bf16.msra.mxu0 %v669
    %735 = vmatprep.subr.bf16.mxu0 %v672
    %736 = vmatpush1.bf16.msra.mxu0 %v671
    %737 = vmatprep.subr.bf16.mxu0 %v674
    %738 = vmatpush1.bf16.msra.mxu0 %v673
    %739 = vmatprep.subr.bf16.mxu0 %v676
    %740 = vmatpush1.bf16.msra.mxu0 %v675
    %741 = vmatprep.subr.bf16.mxu0 %v678
    %742 = vmatpush1.bf16.msra.mxu0 %v677
    %743 = vmatprep.subr.bf16.mxu0 %v680
    %744 = vmatpush1.bf16.msra.mxu0 %v679
    %745 = vmatprep.mubr.bf16.mxu0 %v508
    %746 = vmatmul.mubr.bf16.gmra.mrb[0].mxu0 %v507
    %v747 = vpop.f32.mrb[0].mxu0
    %v748 = vadd.f32 %v546, %v747
    %v749 = vpop.f32.mrb[0].mxu0
    %v750 = vadd.f32 %v550, %v749
    %v751 = vpop.f32.mrb[0].mxu0
    %v752 = vpop.f32.mrb[0].mxu0
    %753 = vdwg.mxu0
    %v754 = vmax.f32 %v748, 0.0
    %v755 = vmax.f32 %v750, 0.0
    %v756 = vpack.c.bf16 %v754, %v754
    %v757 = vpack.c.bf16 %v755, %v755
    %v758 = vld [vmem:[#allocation10] sm:$0xf]
    %v759 = vld [vmem:[#allocation10 + $0x4] sm:$0xf]
    %v760 = vld [vmem:[#allocation10 + $0x8] sm:$0xf]
    %v761 = vld [vmem:[#allocation10 + $0xc] sm:$0xf]
    %v762 = vld [vmem:[#allocation10 + $0x10] sm:$0xf]
    %v763 = vld [vmem:[#allocation10 + $0x14] sm:$0xf]
    %v764 = vld [vmem:[#allocation10 + $0x18] sm:$0xf]
    %v765 = vld [vmem:[#allocation10 + $0x1c] sm:$0xf]
    %v766 = vld [vmem:[#allocation10 + $0x20] sm:$0xf]
    %v767 = vld [vmem:[#allocation10 + $0x24] sm:$0xf]
    %v768 = vld [vmem:[#allocation10 + $0x28] sm:$0xf]
    %v769 = vld [vmem:[#allocation10 + $0x2c] sm:$0xf]
    %v770 = vld [vmem:[#allocation10 + $0x30] sm:$0xf]
    %v771 = vld [vmem:[#allocation10 + $0x34] sm:$0xf]
    %v772 = vld [vmem:[#allocation10 + $0x38] sm:$0xf]
    %v773 = vld [vmem:[#allocation10 + $0x3c] sm:$0xf]
    %v774 = vld [vmem:[#allocation10 + $0x40] sm:$0xf]
    %v775 = vld [vmem:[#allocation10 + $0x44] sm:$0xf]
    %v776 = vld [vmem:[#allocation10 + $0x48] sm:$0xf]
    %v777 = vld [vmem:[#allocation10 + $0x4c] sm:$0xf]
    %v778 = vld [vmem:[#allocation10 + $0x50] sm:$0xf]
    %v779 = vld [vmem:[#allocation10 + $0x54] sm:$0xf]
    %v780 = vld [vmem:[#allocation10 + $0x58] sm:$0xf]
    %v781 = vld [vmem:[#allocation10 + $0x5c] sm:$0xf]
    %v782 = vld [vmem:[#allocation10 + $0x60] sm:$0xf]
    %v783 = vld [vmem:[#allocation10 + $0x64] sm:$0xf]
    %v784 = vld [vmem:[#allocation10 + $0x68] sm:$0xf]
    %v785 = vld [vmem:[#allocation10 + $0x6c] sm:$0xf]
    %v786 = vld [vmem:[#allocation10 + $0x70] sm:$0xf]
    %v787 = vld [vmem:[#allocation10 + $0x74] sm:$0xf]
    %v788 = vld [vmem:[#allocation10 + $0x78] sm:$0xf]
    %v789 = vld [vmem:[#allocation10 + $0x7c] sm:$0xf]
    %v790 = vld [vmem:[%s8] sm:$0x1]
    %v792 = vlaneseq
    %v793 = vshrl.u32 %v792, 7
    %v794 = vsub.s32 0, %v793
    %v795 = vrot.slane %v790, %v794
    %v829 = vunpack.c.l.b16 %v758
    %v830 = vunpack.c.l.b16 %v759
    %v831 = vunpack.c.l.b16 %v760
    %v832 = vunpack.c.l.b16 %v761
    %v833 = vunpack.c.l.b16 %v762
    %v834 = vunpack.c.l.b16 %v763
    %v835 = vunpack.c.l.b16 %v764
    %v836 = vunpack.c.l.b16 %v765
    %v837 = vunpack.c.l.b16 %v766
    %v838 = vunpack.c.l.b16 %v767
    %v839 = vunpack.c.l.b16 %v768
    %v840 = vunpack.c.l.b16 %v769
    %v841 = vunpack.c.l.b16 %v770
    %v842 = vunpack.c.l.b16 %v771
    %v843 = vunpack.c.l.b16 %v772
    %v844 = vunpack.c.l.b16 %v773
    %v845 = vunpack.c.l.b16 %v774
    %v846 = vunpack.c.l.b16 %v775
    %v847 = vunpack.c.l.b16 %v776
    %v848 = vunpack.c.l.b16 %v777
    %v849 = vunpack.c.l.b16 %v778
    %v850 = vunpack.c.l.b16 %v779
    %v851 = vunpack.c.l.b16 %v780
    %v852 = vunpack.c.l.b16 %v781
    %v853 = vunpack.c.l.b16 %v782
    %v854 = vunpack.c.l.b16 %v783
    %v855 = vunpack.c.l.b16 %v784
    %v856 = vunpack.c.l.b16 %v785
    %v857 = vunpack.c.l.b16 %v786
    %v858 = vunpack.c.l.b16 %v787
    %v859 = vunpack.c.l.b16 %v788
    %v860 = vunpack.c.l.b16 %v789
    %v861 = vpack.c.b16 %v830, %v829
    %v862 = vpack.c.b16 %v832, %v831
    %v863 = vpack.c.b16 %v834, %v833
    %v864 = vpack.c.b16 %v836, %v835
    %v865 = vpack.c.b16 %v838, %v837
    %v866 = vpack.c.b16 %v840, %v839
    %v867 = vpack.c.b16 %v842, %v841
    %v868 = vpack.c.b16 %v844, %v843
    %v869 = vpack.c.b16 %v846, %v845
    %v870 = vpack.c.b16 %v848, %v847
    %v871 = vpack.c.b16 %v850, %v849
    %v872 = vpack.c.b16 %v852, %v851
    %v873 = vpack.c.b16 %v854, %v853
    %v874 = vpack.c.b16 %v856, %v855
    %v875 = vpack.c.b16 %v858, %v857
    %v876 = vpack.c.b16 %v860, %v859
    %893 = vmatprep.subr.bf16.mxu0 0
    %894 = vmatpush1.bf16.msra.mxu0 %v861
    %895 = vmatprep.subr.bf16.mxu0 0
    %896 = vmatpush1.bf16.msra.mxu0 %v862
    %897 = vmatprep.subr.bf16.mxu0 0
    %898 = vmatpush1.bf16.msra.mxu0 %v863
    %899 = vmatprep.subr.bf16.mxu0 0
    %900 = vmatpush1.bf16.msra.mxu0 %v864
    %901 = vmatprep.subr.bf16.mxu0 0
    %902 = vmatpush1.bf16.msra.mxu0 %v865
    %903 = vmatprep.subr.bf16.mxu0 0
    %904 = vmatpush1.bf16.msra.mxu0 %v866
    %905 = vmatprep.subr.bf16.mxu0 0
    %906 = vmatpush1.bf16.msra.mxu0 %v867
    %907 = vmatprep.subr.bf16.mxu0 0
    %908 = vmatpush1.bf16.msra.mxu0 %v868
    %909 = vmatprep.subr.bf16.mxu0 0
    %910 = vmatpush1.bf16.msra.mxu0 %v869
    %911 = vmatprep.subr.bf16.mxu0 0
    %912 = vmatpush1.bf16.msra.mxu0 %v870
    %913 = vmatprep.subr.bf16.mxu0 0
    %914 = vmatpush1.bf16.msra.mxu0 %v871
    %915 = vmatprep.subr.bf16.mxu0 0
    %916 = vmatpush1.bf16.msra.mxu0 %v872
    %917 = vmatprep.subr.bf16.mxu0 0
    %918 = vmatpush1.bf16.msra.mxu0 %v873
    %919 = vmatprep.subr.bf16.mxu0 0
    %920 = vmatpush1.bf16.msra.mxu0 %v874
    %921 = vmatprep.subr.bf16.mxu0 0
    %922 = vmatpush1.bf16.msra.mxu0 %v875
    %923 = vmatprep.subr.bf16.mxu0 0
    %924 = vmatpush1.bf16.msra.mxu0 %v876
    %925 = vmatprep.mubr.bf16.mxu0 %v757
    %926 = vmatmul.mubr.bf16.gmra.mrb[0].mxu0 %v756
    %v927 = vpop.f32.mrb[0].mxu0
    %v928 = vadd.f32 %v795, %v927
    %v929 = vpop.f32.mrb[0].mxu0
    %v930 = vpop.f32.mrb[0].mxu0
    %v931 = vpop.f32.mrb[0].mxu0
    %932 = vdwg.mxu0
    %v933 = vld [vmem:[%s9] sm:$0x1]
    %v935 = vlaneseq
    %v936 = vshrl.u32 %v935, 7
    %v937 = vsub.s32 0, %v936
    %v938 = vrot.slane %v933, %v937
    %v940 = vmax.f32 %v928, %v938
    %v941 = vld [vmem:[%s10] sm:$0x1]
    %v943 = vlaneseq
    %v944 = vshrl.u32 %v943, 7
    %v945 = vsub.s32 0, %v944
    %v946 = vrot.slane %v941, %v945
    %v948 = vmin.f32 %v940, %v946
    %v949 = vpack.c.bf16 %v948, %v948
    %950 = vst [vmem:[#allocation11] sm:$0xf] %v949
    // Predicated region
    $region66: #{tpu_custom_call.1} parent=1 // pred_check
      _
    $region67: #{tpu_custom_call.1} parent=1 // pred_check_branch
      %952 = sbr.rel (0) target = $region69
    $region68: #{tpu_custom_call.1} parent=1 // pred_region
      %s954 = ssub.s32 64, 64
      %955 = vsyncadd [#allocation4], %s954
      %s957 = sshll.u32 [#allocation11], 4
      %s958 = int_to_ptr.vmem [resolvable:$true] %s957
      %960 = dma.vmem_to_hbm [thread:$0]  %s958, 64, %s11, [#allocation4]
    $region69: #{tpu_custom_call.1} parent=1 // pred_fallthru
      _
    // Predicated region
    $region70: #{tpu_custom_call.1} parent=1 // pred_check
      _
    $region71: #{tpu_custom_call.1} parent=1 // pred_check_branch
      %962 = sbr.rel (0) target = $region73
    $region72: #{tpu_custom_call.1} parent=1 // pred_region
      %963 = dma.done [#allocation4], 64
    $region73: #{tpu_custom_call.1} parent=1 // pred_fallthru
      _
    %964 = vsyncpa [#allocation3], 1
    %965 = vsyncpa [#allocation6], 1
    %966 = vsyncpa [#allocation9], 1
    %967 = vsyncpa [#allocation4], 1

// kernel: tpu_custom_call.1
$region0: #{tpu_custom_call.1}
  #allocation0 [shape = 'u32[]', space=smem, size = 0x4, offset = 0x4, fixed_abs, tag = 'smem constant byte address 0x4 - core index']
  #allocation1 [shape = 'u32[144,128]{1,0:T(1,128)}', space=vmem, size = 0x12000, scoped, tag = 'internal scratch']
  %s0 = inlined_call_operand.hbm [shape: bf16[8,128], index: 0, kind: input, shape index: {}]
  %s1 = inlined_call_operand.hbm [shape: bf16[128,256], index: 1, kind: input, shape index: {}]
  %s2 = inlined_call_operand.vmem [shape: f32[1,256], index: 2, kind: input, shape index: {}]
  %s3 = inlined_call_operand.hbm [shape: bf16[256,256], index: 3, kind: input, shape index: {}]
  %s4 = inlined_call_operand.vmem [shape: f32[1,256], index: 4, kind: input, shape index: {}]
  %s5 = inlined_call_operand.hbm [shape: bf16[256,256], index: 5, kind: input, shape index: {}]
  %s6 = inlined_call_operand.vmem [shape: f32[1,256], index: 6, kind: input, shape index: {}]
  %s7 = inlined_call_operand.hbm [shape: bf16[256,128], index: 7, kind: input, shape index: {}]
  %s8 = inlined_call_operand.vmem [shape: f32[1,128], index: 8, kind: input, shape index: {}]
  %s9 = inlined_call_operand.vmem [shape: f32[1,128], index: 9, kind: input, shape index: {}]
  %s10 = inlined_call_operand.vmem [shape: f32[1,128], index: 10, kind: input, shape index: {}]
  %s11 = inlined_call_operand.hbm [shape: bf16[8,128], index: 11, kind: output, shape index: {}]
  %s12 = sld [smem:[#allocation0]]
  $region74: #{tpu_custom_call.1} parent=0
    _
  %s14 = ssub.s32 1, %s12
  %s15 = scalar_select 0, %s14, %s12
  $region1: #{tpu_custom_call.1} parent=0
    #allocation2 [shape = 'u8[2048]{0}', space=vmem, size = 0x800, scoped, tag = 'input window, operand 0, single buffered']
    #allocation3 [shape = 's32[1]{0}', space=sflag, size = 0x4, scoped, tag = 'scoped memory for tpu_custom_call.1']
    #allocation4 [shape = 's32[1]{0}', space=sflag, size = 0x4, scoped, tag = 'scoped memory for tpu_custom_call.1']
    #allocation5 [shape = 'u8[65536]{0}', space=vmem, size = 0x10000, scoped, tag = 'input window, operand 1, single buffered']
    #allocation6 [shape = 's32[1]{0}', space=sflag, size = 0x4, scoped, tag = 'scoped memory for tpu_custom_call.1']
    #allocation7 [shape = 'u8[131072]{0}', space=vmem, size = 0x20000, scoped, tag = 'input window, operand 3, single buffered']
    #allocation8 [shape = 'u8[131072]{0}', space=vmem, size = 0x20000, scoped, tag = 'input window, operand 5, single buffered']
    #allocation9 [shape = 's32[1]{0}', space=sflag, size = 0x4, scoped, tag = 'scoped memory for tpu_custom_call.1']
    #allocation10 [shape = 'u8[65536]{0}', space=vmem, size = 0x10000, scoped, tag = 'input window, operand 7, single buffered']
    #allocation11 [shape = 'u8[2048]{0}', space=vmem, size = 0x800, scoped, tag = 'output window, operand 0, single buffered']
    %16 = vsyncpa [#allocation3], 0
    %17 = vsyncpa [#allocation6], 0
    %18 = vsyncpa [#allocation9], 0
    %19 = vsyncpa [#allocation4], 0
    // Predicated region
    $region2: #{tpu_custom_call.1} parent=1 // pred_check
      _
    $region3: #{tpu_custom_call.1} parent=1 // pred_check_branch
      %21 = sbr.rel (0) target = $region5
    $region4: #{tpu_custom_call.1} parent=1 // pred_region
      %s23 = ssub.s32 64, 64
      %24 = vsyncadd [#allocation3], %s23
      %s26 = sshll.u32 [#allocation2], 4
      %s27 = int_to_ptr.vmem [resolvable:$true] %s26
      %29 = dma.hbm_to_vmem [thread:$0]  %s0, 64, %s27, [#allocation3]
    $region5: #{tpu_custom_call.1} parent=1 // pred_fallthru
      _
    // Predicated region
    $region6: #{tpu_custom_call.1} parent=1 // pred_check
      _
    $region7: #{tpu_custom_call.1} parent=1 // pred_check_branch
      %31 = sbr.rel (0) target = $region9
    $region8: #{tpu_custom_call.1} parent=1 // pred_region
      %s33 = ssub.s32 2048, 2048
      %34 = vsyncadd [#allocation6], %s33
      %s35 = sshll.u32 [#allocation5], 4
      %s36 = int_to_ptr.vmem [resolvable:$true] %s35
      %41 = dma.hbm_to_vmem [thread:$0]  %s1, 2048, %s36, [#allocation6], 128, 128, 8
    $region9: #{tpu_custom_call.1} parent=1 // pred_fallthru
      _
    // Predicated region
    $region10: #{tpu_custom_call.1} parent=1 // pred_check
      _
    $region11: #{tpu_custom_call.1} parent=1 // pred_check_branch
      %43 = sbr.rel (0) target = $region13
    $region12: #{tpu_custom_call.1} parent=1 // pred_region
      _
    $region13: #{tpu_custom_call.1} parent=1 // pred_fallthru
      _
    // Predicated region
    $region14: #{tpu_custom_call.1} parent=1 // pred_check
      _
    $region15: #{tpu_custom_call.1} parent=1 // pred_check_branch
      %45 = sbr.rel (0) target = $region17
    $region16: #{tpu_custom_call.1} parent=1 // pred_region
      %s47 = ssub.s32 4096, 4096
      %48 = vsyncadd [#allocation6], %s47
      %s49 = sshll.u32 [#allocation7], 4
      %s50 = int_to_ptr.vmem [resolvable:$true] %s49
      %55 = dma.hbm_to_vmem [thread:$0]  %s3, 4096, %s50, [#allocation6], 128, 128, 8
    $region17: #{tpu_custom_call.1} parent=1 // pred_fallthru
      _
    // Predicated region
    $region18: #{tpu_custom_call.1} parent=1 // pred_check
      _
    $region19: #{tpu_custom_call.1} parent=1 // pred_check_branch
      %57 = sbr.rel (0) target = $region21
    $region20: #{tpu_custom_call.1} parent=1 // pred_region
      _
    $region21: #{tpu_custom_call.1} parent=1 // pred_fallthru
      _
    // Predicated region
    $region22: #{tpu_custom_call.1} parent=1 // pred_check
      _
    $region23: #{tpu_custom_call.1} parent=1 // pred_check_branch
      %59 = sbr.rel (0) target = $region25
    $region24: #{tpu_custom_call.1} parent=1 // pred_region
      %s61 = ssub.s32 4096, 4096
      %62 = vsyncadd [#allocation9], %s61
      %s63 = sshll.u32 [#allocation8], 4
      %s64 = int_to_ptr.vmem [resolvable:$true] %s63
      %69 = dma.hbm_to_vmem [thread:$0]  %s5, 4096, %s64, [#allocation9], 128, 128, 8
    $region25: #{tpu_custom_call.1} parent=1 // pred_fallthru
      _
    // Predicated region
    $region26: #{tpu_custom_call.1} parent=1 // pred_check
      _
    $region27: #{tpu_custom_call.1} parent=1 // pred_check_branch
      %71 = sbr.rel (0) target = $region29
    $region28: #{tpu_custom_call.1} parent=1 // pred_region
      _
    $region29: #{tpu_custom_call.1} parent=1 // pred_fallthru
      _
    // Predicated region
    $region30: #{tpu_custom_call.1} parent=1 // pred_check
      _
    $region31: #{tpu_custom_call.1} parent=1 // pred_check_branch
      %73 = sbr.rel (0) target = $region33
    $region32: #{tpu_custom_call.1} parent=1 // pred_region
      %s75 = ssub.s32 2048, 2048
      %76 = vsyncadd [#allocation9], %s75
      %s77 = sshll.u32 [#allocation10], 4
      %s78 = int_to_ptr.vmem [resolvable:$true] %s77
      %83 = dma.hbm_to_vmem [thread:$0]  %s7, 2048, %s78, [#allocation9], 64, 64, 4
    $region33: #{tpu_custom_call.1} parent=1 // pred_fallthru
      _
    // Predicated region
    $region34: #{tpu_custom_call.1} parent=1 // pred_check
      _
    $region35: #{tpu_custom_call.1} parent=1 // pred_check_branch
      %85 = sbr.rel (0) target = $region37
    $region36: #{tpu_custom_call.1} parent=1 // pred_region
      _
    $region37: #{tpu_custom_call.1} parent=1 // pred_fallthru
      _
    // Predicated region
    $region38: #{tpu_custom_call.1} parent=1 // pred_check
      _
    $region39: #{tpu_custom_call.1} parent=1 // pred_check_branch
      %87 = sbr.rel (0) target = $region41
    $region40: #{tpu_custom_call.1} parent=1 // pred_region
      _
    $region41: #{tpu_custom_call.1} parent=1 // pred_fallthru
      _
    // Predicated region
    $region42: #{tpu_custom_call.1} parent=1 // pred_check
      _
    $region43: #{tpu_custom_call.1} parent=1 // pred_check_branch
      %89 = sbr.rel (0) target = $region45
    $region44: #{tpu_custom_call.1} parent=1 // pred_region
      _
    $region45: #{tpu_custom_call.1} parent=1 // pred_fallthru
      _
    // Predicated region
    $region46: #{tpu_custom_call.1} parent=1 // pred_check
      _
    $region47: #{tpu_custom_call.1} parent=1 // pred_check_branch
      %91 = sbr.rel (0) target = $region49
    $region48: #{tpu_custom_call.1} parent=1 // pred_region
      %92 = dma.done [#allocation3], 64
    $region49: #{tpu_custom_call.1} parent=1 // pred_fallthru
      _
    // Predicated region
    $region50: #{tpu_custom_call.1} parent=1 // pred_check
      _
    $region51: #{tpu_custom_call.1} parent=1 // pred_check_branch
      %94 = sbr.rel (0) target = $region53
    $region52: #{tpu_custom_call.1} parent=1 // pred_region
      %95 = dma.done [#allocation6], 2048
    $region53: #{tpu_custom_call.1} parent=1 // pred_fallthru
      _
    // Predicated region
    $region54: #{tpu_custom_call.1} parent=1 // pred_check
      _
    $region55: #{tpu_custom_call.1} parent=1 // pred_check_branch
      %97 = sbr.rel (0) target = $region57
    $region56: #{tpu_custom_call.1} parent=1 // pred_region
      %98 = dma.done [#allocation6], 4096
    $region57: #{tpu_custom_call.1} parent=1 // pred_fallthru
      _
    // Predicated region
    $region58: #{tpu_custom_call.1} parent=1 // pred_check
      _
    $region59: #{tpu_custom_call.1} parent=1 // pred_check_branch
      %100 = sbr.rel (0) target = $region61
    $region60: #{tpu_custom_call.1} parent=1 // pred_region
      %101 = dma.done [#allocation9], 4096
    $region61: #{tpu_custom_call.1} parent=1 // pred_fallthru
      _
    // Predicated region
    $region62: #{tpu_custom_call.1} parent=1 // pred_check
      _
    $region63: #{tpu_custom_call.1} parent=1 // pred_check_branch
      %103 = sbr.rel (0) target = $region65
    $region64: #{tpu_custom_call.1} parent=1 // pred_region
      %104 = dma.done [#allocation9], 2048
    $region65: #{tpu_custom_call.1} parent=1 // pred_fallthru
      _
    %v106 = vld [vmem:[#allocation2] sm:$0xf]
    %v107 = vld [vmem:[#allocation5] sm:$0xff]
    %v108 = vld [vmem:[#allocation5 + $0x8] sm:$0xff]
    %v109 = vld [vmem:[#allocation5 + $0x10] sm:$0xff]
    %v110 = vld [vmem:[#allocation5 + $0x18] sm:$0xff]
    %v111 = vld [vmem:[#allocation5 + $0x20] sm:$0xff]
    %v112 = vld [vmem:[#allocation5 + $0x28] sm:$0xff]
    %v113 = vld [vmem:[#allocation5 + $0x30] sm:$0xff]
    %v114 = vld [vmem:[#allocation5 + $0x38] sm:$0xff]
    %v115 = vld [vmem:[#allocation5 + $0x40] sm:$0xff]
    %v116 = vld [vmem:[#allocation5 + $0x48] sm:$0xff]
    %v117 = vld [vmem:[#allocation5 + $0x50] sm:$0xff]
    %v118 = vld [vmem:[#allocation5 + $0x58] sm:$0xff]
    %v119 = vld [vmem:[#allocation5 + $0x60] sm:$0xff]
    %v120 = vld [vmem:[#allocation5 + $0x68] sm:$0xff]
    %v121 = vld [vmem:[#allocation5 + $0x70] sm:$0xff]
    %v122 = vld [vmem:[#allocation5 + $0x78] sm:$0xff]
    %v123 = vld [vmem:[%s2] sm:$0x3]
    %v125 = vlaneseq
    %v126 = vshrl.u32 %v125, 7
    %v127 = vsub.s32 0, %v126
    %v128 = vrot.slane %v123, %v127
    %v129 = vlaneseq
    %v130 = vshrl.u32 %v129, 7
    %v131 = vsub.s32 1, %v130
    %v132 = vrot.slane %v123, %v131
    %v151 = vunpack.c.l.b16 %v107
    %v152 = vunpack.c.h.b16 %v107
    %v153 = vunpack.c.l.b16 %v108
    %v154 = vunpack.c.h.b16 %v108
    %v155 = vunpack.c.l.b16 %v109
    %v156 = vunpack.c.h.b16 %v109
    %v157 = vunpack.c.l.b16 %v110
    %v158 = vunpack.c.h.b16 %v110
    %v159 = vunpack.c.l.b16 %v111
    %v160 = vunpack.c.h.b16 %v111
    %v161 = vunpack.c.l.b16 %v112
    %v162 = vunpack.c.h.b16 %v112
    %v163 = vunpack.c.l.b16 %v113
    %v164 = vunpack.c.h.b16 %v113
    %v165 = vunpack.c.l.b16 %v114
    %v166 = vunpack.c.h.b16 %v114
    %v167 = vunpack.c.l.b16 %v115
    %v168 = vunpack.c.h.b16 %v115
    %v169 = vunpack.c.l.b16 %v116
    %v170 = vunpack.c.h.b16 %v116
    %v171 = vunpack.c.l.b16 %v117
    %v172 = vunpack.c.h.b16 %v117
    %v173 = vunpack.c.l.b16 %v118
    %v174 = vunpack.c.h.b16 %v118
    %v175 = vunpack.c.l.b16 %v119
    %v176 = vunpack.c.h.b16 %v119
    %v177 = vunpack.c.l.b16 %v120
    %v178 = vunpack.c.h.b16 %v120
    %v179 = vunpack.c.l.b16 %v121
    %v180 = vunpack.c.h.b16 %v121
    %v181 = vunpack.c.l.b16 %v122
    %v182 = vunpack.c.h.b16 %v122
    %v183 = vpack.c.b16 %v153, %v151
    %v184 = vpack.c.b16 %v154, %v152
    %v185 = vpack.c.b16 %v157, %v155
    %v186 = vpack.c.b16 %v158, %v156
    %v187 = vpack.c.b16 %v161, %v159
    %v188 = vpack.c.b16 %v162, %v160
    %v189 = vpack.c.b16 %v165, %v163
    %v190 = vpack.c.b16 %v166, %v164
    %v191 = vpack.c.b16 %v169, %v167
    %v192 = vpack.c.b16 %v170, %v168
    %v193 = vpack.c.b16 %v173, %v171
    %v194 = vpack.c.b16 %v174, %v172
    %v195 = vpack.c.b16 %v177, %v175
    %v196 = vpack.c.b16 %v178, %v176
    %v197 = vpack.c.b16 %v181, %v179
    %v198 = vpack.c.b16 %v182, %v180
    %215 = vmatprep.subr.bf16.mxu0 %v184
    %216 = vmatpush1.bf16.msra.mxu0 %v183
    %217 = vmatprep.subr.bf16.mxu0 %v186
    %218 = vmatpush1.bf16.msra.mxu0 %v185
    %219 = vmatprep.subr.bf16.mxu0 %v188
    %220 = vmatpush1.bf16.msra.mxu0 %v187
    %221 = vmatprep.subr.bf16.mxu0 %v190
    %222 = vmatpush1.bf16.msra.mxu0 %v189
    %223 = vmatprep.subr.bf16.mxu0 %v192
    %224 = vmatpush1.bf16.msra.mxu0 %v191
    %225 = vmatprep.subr.bf16.mxu0 %v194
    %226 = vmatpush1.bf16.msra.mxu0 %v193
    %227 = vmatprep.subr.bf16.mxu0 %v196
    %228 = vmatpush1.bf16.msra.mxu0 %v195
    %229 = vmatprep.subr.bf16.mxu0 %v198
    %230 = vmatpush1.bf16.msra.mxu0 %v197
    %231 = vmatprep.subr.bf16.mxu0 0
    %232 = vmatpush1.bf16.msra.mxu0 0
    %233 = vmatprep.subr.bf16.mxu0 0
    %234 = vmatpush1.bf16.msra.mxu0 0
    %235 = vmatprep.subr.bf16.mxu0 0
    %236 = vmatpush1.bf16.msra.mxu0 0
    %237 = vmatprep.subr.bf16.mxu0 0
    %238 = vmatpush1.bf16.msra.mxu0 0
    %239 = vmatprep.subr.bf16.mxu0 0
    %240 = vmatpush1.bf16.msra.mxu0 0
    %241 = vmatprep.subr.bf16.mxu0 0
    %242 = vmatpush1.bf16.msra.mxu0 0
    %243 = vmatprep.subr.bf16.mxu0 0
    %244 = vmatpush1.bf16.msra.mxu0 0
    %245 = vmatprep.subr.bf16.mxu0 0
    %246 = vmatpush1.bf16.msra.mxu0 0
    %247 = vmatprep.mubr.bf16.mxu0 0
    %248 = vmatmul.mubr.bf16.gmra.mrb[0].mxu0 %v106
    %v249 = vpop.f32.mrb[0].mxu0
    %v250 = vadd.f32 %v128, %v249
    %v251 = vpop.f32.mrb[0].mxu0
    %v252 = vadd.f32 %v132, %v251
    %v253 = vpop.f32.mrb[0].mxu0
    %v254 = vpop.f32.mrb[0].mxu0
    %255 = vdwg.mxu0
    %v256 = vmax.f32 %v250, 0.0
    %v257 = vmax.f32 %v252, 0.0
    %v258 = vpack.c.bf16 %v256, %v256
    %v259 = vpack.c.bf16 %v257, %v257
    %v260 = vld [vmem:[#allocation7] sm:$0xff]
    %v261 = vld [vmem:[#allocation7 + $0x8] sm:$0xff]
    %v262 = vld [vmem:[#allocation7 + $0x10] sm:$0xff]
    %v263 = vld [vmem:[#allocation7 + $0x18] sm:$0xff]
    %v264 = vld [vmem:[#allocation7 + $0x20] sm:$0xff]
    %v265 = vld [vmem:[#allocation7 + $0x28] sm:$0xff]
    %v266 = vld [vmem:[#allocation7 + $0x30] sm:$0xff]
    %v267 = vld [vmem:[#allocation7 + $0x38] sm:$0xff]
    %v268 = vld [vmem:[#allocation7 + $0x40] sm:$0xff]
    %v269 = vld [vmem:[#allocation7 + $0x48] sm:$0xff]
    %v270 = vld [vmem:[#allocation7 + $0x50] sm:$0xff]
    %v271 = vld [vmem:[#allocation7 + $0x58] sm:$0xff]
    %v272 = vld [vmem:[#allocation7 + $0x60] sm:$0xff]
    %v273 = vld [vmem:[#allocation7 + $0x68] sm:$0xff]
    %v274 = vld [vmem:[#allocation7 + $0x70] sm:$0xff]
    %v275 = vld [vmem:[#allocation7 + $0x78] sm:$0xff]
    %v276 = vld [vmem:[#allocation7 + $0x80] sm:$0xff]
    %v277 = vld [vmem:[#allocation7 + $0x88] sm:$0xff]
    %v278 = vld [vmem:[#allocation7 + $0x90] sm:$0xff]
    %v279 = vld [vmem:[#allocation7 + $0x98] sm:$0xff]
    %v280 = vld [vmem:[#allocation7 + $0xa0] sm:$0xff]
    %v281 = vld [vmem:[#allocation7 + $0xa8] sm:$0xff]
    %v282 = vld [vmem:[#allocation7 + $0xb0] sm:$0xff]
    %v283 = vld [vmem:[#allocation7 + $0xb8] sm:$0xff]
    %v284 = vld [vmem:[#allocation7 + $0xc0] sm:$0xff]
    %v285 = vld [vmem:[#allocation7 + $0xc8] sm:$0xff]
    %v286 = vld [vmem:[#allocation7 + $0xd0] sm:$0xff]
    %v287 = vld [vmem:[#allocation7 + $0xd8] sm:$0xff]
    %v288 = vld [vmem:[#allocation7 + $0xe0] sm:$0xff]
    %v289 = vld [vmem:[#allocation7 + $0xe8] sm:$0xff]
    %v290 = vld [vmem:[#allocation7 + $0xf0] sm:$0xff]
    %v291 = vld [vmem:[#allocation7 + $0xf8] sm:$0xff]
    %v292 = vld [vmem:[%s4] sm:$0x3]
    %v294 = vlaneseq
    %v295 = vshrl.u32 %v294, 7
    %v296 = vsub.s32 0, %v295
    %v297 = vrot.slane %v292, %v296
    %v298 = vlaneseq
    %v299 = vshrl.u32 %v298, 7
    %v300 = vsub.s32 1, %v299
    %v301 = vrot.slane %v292, %v300
    %v336 = vunpack.c.l.b16 %v260
    %v337 = vunpack.c.h.b16 %v260
    %v338 = vunpack.c.l.b16 %v261
    %v339 = vunpack.c.h.b16 %v261
    %v340 = vunpack.c.l.b16 %v262
    %v341 = vunpack.c.h.b16 %v262
    %v342 = vunpack.c.l.b16 %v263
    %v343 = vunpack.c.h.b16 %v263
    %v344 = vunpack.c.l.b16 %v264
    %v345 = vunpack.c.h.b16 %v264
    %v346 = vunpack.c.l.b16 %v265
    %v347 = vunpack.c.h.b16 %v265
    %v348 = vunpack.c.l.b16 %v266
    %v349 = vunpack.c.h.b16 %v266
    %v350 = vunpack.c.l.b16 %v267
    %v351 = vunpack.c.h.b16 %v267
    %v352 = vunpack.c.l.b16 %v268
    %v353 = vunpack.c.h.b16 %v268
    %v354 = vunpack.c.l.b16 %v269
    %v355 = vunpack.c.h.b16 %v269
    %v356 = vunpack.c.l.b16 %v270
    %v357 = vunpack.c.h.b16 %v270
    %v358 = vunpack.c.l.b16 %v271
    %v359 = vunpack.c.h.b16 %v271
    %v360 = vunpack.c.l.b16 %v272
    %v361 = vunpack.c.h.b16 %v272
    %v362 = vunpack.c.l.b16 %v273
    %v363 = vunpack.c.h.b16 %v273
    %v364 = vunpack.c.l.b16 %v274
    %v365 = vunpack.c.h.b16 %v274
    %v366 = vunpack.c.l.b16 %v275
    %v367 = vunpack.c.h.b16 %v275
    %v368 = vunpack.c.l.b16 %v276
    %v369 = vunpack.c.h.b16 %v276
    %v370 = vunpack.c.l.b16 %v277
    %v371 = vunpack.c.h.b16 %v277
    %v372 = vunpack.c.l.b16 %v278
    %v373 = vunpack.c.h.b16 %v278
    %v374 = vunpack.c.l.b16 %v279
    %v375 = vunpack.c.h.b16 %v279
    %v376 = vunpack.c.l.b16 %v280
    %v377 = vunpack.c.h.b16 %v280
    %v378 = vunpack.c.l.b16 %v281
    %v379 = vunpack.c.h.b16 %v281
    %v380 = vunpack.c.l.b16 %v282
    %v381 = vunpack.c.h.b16 %v282
    %v382 = vunpack.c.l.b16 %v283
    %v383 = vunpack.c.h.b16 %v283
    %v384 = vunpack.c.l.b16 %v284
    %v385 = vunpack.c.h.b16 %v284
    %v386 = vunpack.c.l.b16 %v285
    %v387 = vunpack.c.h.b16 %v285
    %v388 = vunpack.c.l.b16 %v286
    %v389 = vunpack.c.h.b16 %v286
    %v390 = vunpack.c.l.b16 %v287
    %v391 = vunpack.c.h.b16 %v287
    %v392 = vunpack.c.l.b16 %v288
    %v393 = vunpack.c.h.b16 %v288
    %v394 = vunpack.c.l.b16 %v289
    %v395 = vunpack.c.h.b16 %v289
    %v396 = vunpack.c.l.b16 %v290
    %v397 = vunpack.c.h.b16 %v290
    %v398 = vunpack.c.l.b16 %v291
    %v399 = vunpack.c.h.b16 %v291
    %v400 = vpack.c.b16 %v338, %v336
    %v401 = vpack.c.b16 %v339, %v337
    %v402 = vpack.c.b16 %v342, %v340
    %v403 = vpack.c.b16 %v343, %v341
    %v404 = vpack.c.b16 %v346, %v344
    %v405 = vpack.c.b16 %v347, %v345
    %v406 = vpack.c.b16 %v350, %v348
    %v407 = vpack.c.b16 %v351, %v349
    %v408 = vpack.c.b16 %v354, %v352
    %v409 = vpack.c.b16 %v355, %v353
    %v410 = vpack.c.b16 %v358, %v356
    %v411 = vpack.c.b16 %v359, %v357
    %v412 = vpack.c.b16 %v362, %v360
    %v413 = vpack.c.b16 %v363, %v361
    %v414 = vpack.c.b16 %v366, %v364
    %v415 = vpack.c.b16 %v367, %v365
    %v416 = vpack.c.b16 %v370, %v368
    %v417 = vpack.c.b16 %v371, %v369
    %v418 = vpack.c.b16 %v374, %v372
    %v419 = vpack.c.b16 %v375, %v373
    %v420 = vpack.c.b16 %v378, %v376
    %v421 = vpack.c.b16 %v379, %v377
    %v422 = vpack.c.b16 %v382, %v380
    %v423 = vpack.c.b16 %v383, %v381
    %v424 = vpack.c.b16 %v386, %v384
    %v425 = vpack.c.b16 %v387, %v385
    %v426 = vpack.c.b16 %v390, %v388
    %v427 = vpack.c.b16 %v391, %v389
    %v428 = vpack.c.b16 %v394, %v392
    %v429 = vpack.c.b16 %v395, %v393
    %v430 = vpack.c.b16 %v398, %v396
    %v431 = vpack.c.b16 %v399, %v397
    %464 = vmatprep.subr.bf16.mxu0 %v401
    %465 = vmatpush1.bf16.msra.mxu0 %v400
    %466 = vmatprep.subr.bf16.mxu0 %v403
    %467 = vmatpush1.bf16.msra.mxu0 %v402
    %468 = vmatprep.subr.bf16.mxu0 %v405
    %469 = vmatpush1.bf16.msra.mxu0 %v404
    %470 = vmatprep.subr.bf16.mxu0 %v407
    %471 = vmatpush1.bf16.msra.mxu0 %v406
    %472 = vmatprep.subr.bf16.mxu0 %v409
    %473 = vmatpush1.bf16.msra.mxu0 %v408
    %474 = vmatprep.subr.bf16.mxu0 %v411
    %475 = vmatpush1.bf16.msra.mxu0 %v410
    %476 = vmatprep.subr.bf16.mxu0 %v413
    %477 = vmatpush1.bf16.msra.mxu0 %v412
    %478 = vmatprep.subr.bf16.mxu0 %v415
    %479 = vmatpush1.bf16.msra.mxu0 %v414
    %480 = vmatprep.subr.bf16.mxu0 %v417
    %481 = vmatpush1.bf16.msra.mxu0 %v416
    %482 = vmatprep.subr.bf16.mxu0 %v419
    %483 = vmatpush1.bf16.msra.mxu0 %v418
    %484 = vmatprep.subr.bf16.mxu0 %v421
    %485 = vmatpush1.bf16.msra.mxu0 %v420
    %486 = vmatprep.subr.bf16.mxu0 %v423
    %487 = vmatpush1.bf16.msra.mxu0 %v422
    %488 = vmatprep.subr.bf16.mxu0 %v425
    %489 = vmatpush1.bf16.msra.mxu0 %v424
    %490 = vmatprep.subr.bf16.mxu0 %v427
    %491 = vmatpush1.bf16.msra.mxu0 %v426
    %492 = vmatprep.subr.bf16.mxu0 %v429
    %493 = vmatpush1.bf16.msra.mxu0 %v428
    %494 = vmatprep.subr.bf16.mxu0 %v431
    %495 = vmatpush1.bf16.msra.mxu0 %v430
    %496 = vmatprep.mubr.bf16.mxu0 %v259
    %497 = vmatmul.mubr.bf16.gmra.mrb[0].mxu0 %v258
    %v498 = vpop.f32.mrb[0].mxu0
    %v499 = vadd.f32 %v297, %v498
    %v500 = vpop.f32.mrb[0].mxu0
    %v501 = vadd.f32 %v301, %v500
    %v502 = vpop.f32.mrb[0].mxu0
    %v503 = vpop.f32.mrb[0].mxu0
    %504 = vdwg.mxu0
    %v505 = vmax.f32 %v499, 0.0
    %v506 = vmax.f32 %v501, 0.0
    %v507 = vpack.c.bf16 %v505, %v505
    %v508 = vpack.c.bf16 %v506, %v506
    %v509 = vld [vmem:[#allocation8] sm:$0xff]
    %v510 = vld [vmem:[#allocation8 + $0x8] sm:$0xff]
    %v511 = vld [vmem:[#allocation8 + $0x10] sm:$0xff]
    %v512 = vld [vmem:[#allocation8 + $0x18] sm:$0xff]
    %v513 = vld [vmem:[#allocation8 + $0x20] sm:$0xff]
    %v514 = vld [vmem:[#allocation8 + $0x28] sm:$0xff]
    %v515 = vld [vmem:[#allocation8 + $0x30] sm:$0xff]
    %v516 = vld [vmem:[#allocation8 + $0x38] sm:$0xff]
    %v517 = vld [vmem:[#allocation8 + $0x40] sm:$0xff]
    %v518 = vld [vmem:[#allocation8 + $0x48] sm:$0xff]
    %v519 = vld [vmem:[#allocation8 + $0x50] sm:$0xff]
    %v520 = vld [vmem:[#allocation8 + $0x58] sm:$0xff]
    %v521 = vld [vmem:[#allocation8 + $0x60] sm:$0xff]
    %v522 = vld [vmem:[#allocation8 + $0x68] sm:$0xff]
    %v523 = vld [vmem:[#allocation8 + $0x70] sm:$0xff]
    %v524 = vld [vmem:[#allocation8 + $0x78] sm:$0xff]
    %v525 = vld [vmem:[#allocation8 + $0x80] sm:$0xff]
    %v526 = vld [vmem:[#allocation8 + $0x88] sm:$0xff]
    %v527 = vld [vmem:[#allocation8 + $0x90] sm:$0xff]
    %v528 = vld [vmem:[#allocation8 + $0x98] sm:$0xff]
    %v529 = vld [vmem:[#allocation8 + $0xa0] sm:$0xff]
    %v530 = vld [vmem:[#allocation8 + $0xa8] sm:$0xff]
    %v531 = vld [vmem:[#allocation8 + $0xb0] sm:$0xff]
    %v532 = vld [vmem:[#allocation8 + $0xb8] sm:$0xff]
    %v533 = vld [vmem:[#allocation8 + $0xc0] sm:$0xff]
    %v534 = vld [vmem:[#allocation8 + $0xc8] sm:$0xff]
    %v535 = vld [vmem:[#allocation8 + $0xd0] sm:$0xff]
    %v536 = vld [vmem:[#allocation8 + $0xd8] sm:$0xff]
    %v537 = vld [vmem:[#allocation8 + $0xe0] sm:$0xff]
    %v538 = vld [vmem:[#allocation8 + $0xe8] sm:$0xff]
    %v539 = vld [vmem:[#allocation8 + $0xf0] sm:$0xff]
    %v540 = vld [vmem:[#allocation8 + $0xf8] sm:$0xff]
    %v541 = vld [vmem:[%s6] sm:$0x3]
    %v543 = vlaneseq
    %v544 = vshrl.u32 %v543, 7
    %v545 = vsub.s32 0, %v544
    %v546 = vrot.slane %v541, %v545
    %v547 = vlaneseq
    %v548 = vshrl.u32 %v547, 7
    %v549 = vsub.s32 1, %v548
    %v550 = vrot.slane %v541, %v549
    %v585 = vunpack.c.l.b16 %v509
    %v586 = vunpack.c.h.b16 %v509
    %v587 = vunpack.c.l.b16 %v510
    %v588 = vunpack.c.h.b16 %v510
    %v589 = vunpack.c.l.b16 %v511
    %v590 = vunpack.c.h.b16 %v511
    %v591 = vunpack.c.l.b16 %v512
    %v592 = vunpack.c.h.b16 %v512
    %v593 = vunpack.c.l.b16 %v513
    %v594 = vunpack.c.h.b16 %v513
    %v595 = vunpack.c.l.b16 %v514
    %v596 = vunpack.c.h.b16 %v514
    %v597 = vunpack.c.l.b16 %v515
    %v598 = vunpack.c.h.b16 %v515
    %v599 = vunpack.c.l.b16 %v516
    %v600 = vunpack.c.h.b16 %v516
    %v601 = vunpack.c.l.b16 %v517
    %v602 = vunpack.c.h.b16 %v517
    %v603 = vunpack.c.l.b16 %v518
    %v604 = vunpack.c.h.b16 %v518
    %v605 = vunpack.c.l.b16 %v519
    %v606 = vunpack.c.h.b16 %v519
    %v607 = vunpack.c.l.b16 %v520
    %v608 = vunpack.c.h.b16 %v520
    %v609 = vunpack.c.l.b16 %v521
    %v610 = vunpack.c.h.b16 %v521
    %v611 = vunpack.c.l.b16 %v522
    %v612 = vunpack.c.h.b16 %v522
    %v613 = vunpack.c.l.b16 %v523
    %v614 = vunpack.c.h.b16 %v523
    %v615 = vunpack.c.l.b16 %v524
    %v616 = vunpack.c.h.b16 %v524
    %v617 = vunpack.c.l.b16 %v525
    %v618 = vunpack.c.h.b16 %v525
    %v619 = vunpack.c.l.b16 %v526
    %v620 = vunpack.c.h.b16 %v526
    %v621 = vunpack.c.l.b16 %v527
    %v622 = vunpack.c.h.b16 %v527
    %v623 = vunpack.c.l.b16 %v528
    %v624 = vunpack.c.h.b16 %v528
    %v625 = vunpack.c.l.b16 %v529
    %v626 = vunpack.c.h.b16 %v529
    %v627 = vunpack.c.l.b16 %v530
    %v628 = vunpack.c.h.b16 %v530
    %v629 = vunpack.c.l.b16 %v531
    %v630 = vunpack.c.h.b16 %v531
    %v631 = vunpack.c.l.b16 %v532
    %v632 = vunpack.c.h.b16 %v532
    %v633 = vunpack.c.l.b16 %v533
    %v634 = vunpack.c.h.b16 %v533
    %v635 = vunpack.c.l.b16 %v534
    %v636 = vunpack.c.h.b16 %v534
    %v637 = vunpack.c.l.b16 %v535
    %v638 = vunpack.c.h.b16 %v535
    %v639 = vunpack.c.l.b16 %v536
    %v640 = vunpack.c.h.b16 %v536
    %v641 = vunpack.c.l.b16 %v537
    %v642 = vunpack.c.h.b16 %v537
    %v643 = vunpack.c.l.b16 %v538
    %v644 = vunpack.c.h.b16 %v538
    %v645 = vunpack.c.l.b16 %v539
    %v646 = vunpack.c.h.b16 %v539
    %v647 = vunpack.c.l.b16 %v540
    %v648 = vunpack.c.h.b16 %v540
    %v649 = vpack.c.b16 %v587, %v585
    %v650 = vpack.c.b16 %v588, %v586
    %v651 = vpack.c.b16 %v591, %v589
    %v652 = vpack.c.b16 %v592, %v590
    %v653 = vpack.c.b16 %v595, %v593
    %v654 = vpack.c.b16 %v596, %v594
    %v655 = vpack.c.b16 %v599, %v597
    %v656 = vpack.c.b16 %v600, %v598
    %v657 = vpack.c.b16 %v603, %v601
    %v658 = vpack.c.b16 %v604, %v602
    %v659 = vpack.c.b16 %v607, %v605
    %v660 = vpack.c.b16 %v608, %v606
    %v661 = vpack.c.b16 %v611, %v609
    %v662 = vpack.c.b16 %v612, %v610
    %v663 = vpack.c.b16 %v615, %v613
    %v664 = vpack.c.b16 %v616, %v614
    %v665 = vpack.c.b16 %v619, %v617
    %v666 = vpack.c.b16 %v620, %v618
    %v667 = vpack.c.b16 %v623, %v621
    %v668 = vpack.c.b16 %v624, %v622
    %v669 = vpack.c.b16 %v627, %v625
    %v670 = vpack.c.b16 %v628, %v626
    %v671 = vpack.c.b16 %v631, %v629
    %v672 = vpack.c.b16 %v632, %v630
    %v673 = vpack.c.b16 %v635, %v633
    %v674 = vpack.c.b16 %v636, %v634
    %v675 = vpack.c.b16 %v639, %v637
    %v676 = vpack.c.b16 %v640, %v638
    %v677 = vpack.c.b16 %v643, %v641
    %v678 = vpack.c.b16 %v644, %v642
    %v679 = vpack.c.b16 %v647, %v645
    %v680 = vpack.c.b16 %v648, %v646
    %713 = vmatprep.subr.bf16.mxu0 %v650
    %714 = vmatpush1.bf16.msra.mxu0 %v649
    %715 = vmatprep.subr.bf16.mxu0 %v652
    %716 = vmatpush1.bf16.msra.mxu0 %v651
    %717 = vmatprep.subr.bf16.mxu0 %v654
    %718 = vmatpush1.bf16.msra.mxu0 %v653
    %719 = vmatprep.subr.bf16.mxu0 %v656
    %720 = vmatpush1.bf16.msra.mxu0 %v655
    %721 = vmatprep.subr.bf16.mxu0 %v658
    %722 = vmatpush1.bf16.msra.mxu0 %v657
    %723 = vmatprep.subr.bf16.mxu0 %v660
    %724 = vmatpush1.bf16.msra.mxu0 %v659
    %725 = vmatprep.subr.bf16.mxu0 %v662
    %726 = vmatpush1.bf16.msra.mxu0 %v661
    %727 = vmatprep.subr.bf16.mxu0 %v664
    %728 = vmatpush1.bf16.msra.mxu0 %v663
    %729 = vmatprep.subr.bf16.mxu0 %v666
    %730 = vmatpush1.bf16.msra.mxu0 %v665
    %731 = vmatprep.subr.bf16.mxu0 %v668
    %732 = vmatpush1.bf16.msra.mxu0 %v667
    %733 = vmatprep.subr.bf16.mxu0 %v670
    %734 = vmatpush1.bf16.msra.mxu0 %v669
    %735 = vmatprep.subr.bf16.mxu0 %v672
    %736 = vmatpush1.bf16.msra.mxu0 %v671
    %737 = vmatprep.subr.bf16.mxu0 %v674
    %738 = vmatpush1.bf16.msra.mxu0 %v673
    %739 = vmatprep.subr.bf16.mxu0 %v676
    %740 = vmatpush1.bf16.msra.mxu0 %v675
    %741 = vmatprep.subr.bf16.mxu0 %v678
    %742 = vmatpush1.bf16.msra.mxu0 %v677
    %743 = vmatprep.subr.bf16.mxu0 %v680
    %744 = vmatpush1.bf16.msra.mxu0 %v679
    %745 = vmatprep.mubr.bf16.mxu0 %v508
    %746 = vmatmul.mubr.bf16.gmra.mrb[0].mxu0 %v507
    %v747 = vpop.f32.mrb[0].mxu0
    %v748 = vadd.f32 %v546, %v747
    %v749 = vpop.f32.mrb[0].mxu0
    %v750 = vadd.f32 %v550, %v749
    %v751 = vpop.f32.mrb[0].mxu0
    %v752 = vpop.f32.mrb[0].mxu0
    %753 = vdwg.mxu0
    %v754 = vmax.f32 %v748, 0.0
    %v755 = vmax.f32 %v750, 0.0
    %v756 = vpack.c.bf16 %v754, %v754
    %v757 = vpack.c.bf16 %v755, %v755
    %v758 = vld [vmem:[#allocation10] sm:$0xf]
    %v759 = vld [vmem:[#allocation10 + $0x4] sm:$0xf]
    %v760 = vld [vmem:[#allocation10 + $0x8] sm:$0xf]
    %v761 = vld [vmem:[#allocation10 + $0xc] sm:$0xf]
    %v762 = vld [vmem:[#allocation10 + $0x10] sm:$0xf]
    %v763 = vld [vmem:[#allocation10 + $0x14] sm:$0xf]
    %v764 = vld [vmem:[#allocation10 + $0x18] sm:$0xf]
    %v765 = vld [vmem:[#allocation10 + $0x1c] sm:$0xf]
    %v766 = vld [vmem:[#allocation10 + $0x20] sm:$0xf]
    %v767 = vld [vmem:[#allocation10 + $0x24] sm:$0xf]
    %v768 = vld [vmem:[#allocation10 + $0x28] sm:$0xf]
    %v769 = vld [vmem:[#allocation10 + $0x2c] sm:$0xf]
    %v770 = vld [vmem:[#allocation10 + $0x30] sm:$0xf]
    %v771 = vld [vmem:[#allocation10 + $0x34] sm:$0xf]
    %v772 = vld [vmem:[#allocation10 + $0x38] sm:$0xf]
    %v773 = vld [vmem:[#allocation10 + $0x3c] sm:$0xf]
    %v774 = vld [vmem:[#allocation10 + $0x40] sm:$0xf]
    %v775 = vld [vmem:[#allocation10 + $0x44] sm:$0xf]
    %v776 = vld [vmem:[#allocation10 + $0x48] sm:$0xf]
    %v777 = vld [vmem:[#allocation10 + $0x4c] sm:$0xf]
    %v778 = vld [vmem:[#allocation10 + $0x50] sm:$0xf]
    %v779 = vld [vmem:[#allocation10 + $0x54] sm:$0xf]
    %v780 = vld [vmem:[#allocation10 + $0x58] sm:$0xf]
    %v781 = vld [vmem:[#allocation10 + $0x5c] sm:$0xf]
    %v782 = vld [vmem:[#allocation10 + $0x60] sm:$0xf]
    %v783 = vld [vmem:[#allocation10 + $0x64] sm:$0xf]
    %v784 = vld [vmem:[#allocation10 + $0x68] sm:$0xf]
    %v785 = vld [vmem:[#allocation10 + $0x6c] sm:$0xf]
    %v786 = vld [vmem:[#allocation10 + $0x70] sm:$0xf]
    %v787 = vld [vmem:[#allocation10 + $0x74] sm:$0xf]
    %v788 = vld [vmem:[#allocation10 + $0x78] sm:$0xf]
    %v789 = vld [vmem:[#allocation10 + $0x7c] sm:$0xf]
    %v790 = vld [vmem:[%s8] sm:$0x1]
    %v792 = vlaneseq
    %v793 = vshrl.u32 %v792, 7
    %v794 = vsub.s32 0, %v793
    %v795 = vrot.slane %v790, %v794
    %v829 = vunpack.c.l.b16 %v758
    %v830 = vunpack.c.l.b16 %v759
    %v831 = vunpack.c.l.b16 %v760
    %v832 = vunpack.c.l.b16 %v761
    %v833 = vunpack.c.l.b16 %v762
    %v834 = vunpack.c.l.b16 %v763
    %v835 = vunpack.c.l.b16 %v764
    %v836 = vunpack.c.l.b16 %v765
    %v837 = vunpack.c.l.b16 %v766
    %v838 = vunpack.c.l.b16 %v767
    %v839 = vunpack.c.l.b16 %v768
    %v840 = vunpack.c.l.b16 %v769
    %v841 = vunpack.c.l.b16 %v770
    %v842 = vunpack.c.l.b16 %v771
    %v843 = vunpack.c.l.b16 %v772
    %v844 = vunpack.c.l.b16 %v773
    %v845 = vunpack.c.l.b16 %v774
    %v846 = vunpack.c.l.b16 %v775
    %v847 = vunpack.c.l.b16 %v776
    %v848 = vunpack.c.l.b16 %v777
    %v849 = vunpack.c.l.b16 %v778
    %v850 = vunpack.c.l.b16 %v779
    %v851 = vunpack.c.l.b16 %v780
    %v852 = vunpack.c.l.b16 %v781
    %v853 = vunpack.c.l.b16 %v782
    %v854 = vunpack.c.l.b16 %v783
    %v855 = vunpack.c.l.b16 %v784
    %v856 = vunpack.c.l.b16 %v785
    %v857 = vunpack.c.l.b16 %v786
    %v858 = vunpack.c.l.b16 %v787
    %v859 = vunpack.c.l.b16 %v788
    %v860 = vunpack.c.l.b16 %v789
    %v861 = vpack.c.b16 %v830, %v829
    %v862 = vpack.c.b16 %v832, %v831
    %v863 = vpack.c.b16 %v834, %v833
    %v864 = vpack.c.b16 %v836, %v835
    %v865 = vpack.c.b16 %v838, %v837
    %v866 = vpack.c.b16 %v840, %v839
    %v867 = vpack.c.b16 %v842, %v841
    %v868 = vpack.c.b16 %v844, %v843
    %v869 = vpack.c.b16 %v846, %v845
    %v870 = vpack.c.b16 %v848, %v847
    %v871 = vpack.c.b16 %v850, %v849
    %v872 = vpack.c.b16 %v852, %v851
    %v873 = vpack.c.b16 %v854, %v853
    %v874 = vpack.c.b16 %v856, %v855
    %v875 = vpack.c.b16 %v858, %v857
    %v876 = vpack.c.b16 %v860, %v859
    %893 = vmatprep.subr.bf16.mxu0 0
    %894 = vmatpush1.bf16.msra.mxu0 %v861
    %895 = vmatprep.subr.bf16.mxu0 0
    %896 = vmatpush1.bf16.msra.mxu0 %v862
    %897 = vmatprep.subr.bf16.mxu0 0
    %898 = vmatpush1.bf16.msra.mxu0 %v863
    %899 = vmatprep.subr.bf16.mxu0 0
    %900 = vmatpush1.bf16.msra.mxu0 %v864
    %901 = vmatprep.subr.bf16.mxu0 0
    %902 = vmatpush1.bf16.msra.mxu0 %v865
    %903 = vmatprep.subr.bf16.mxu0 0
    %904 = vmatpush1.bf16.msra.mxu0 %v866
    %905 = vmatprep.subr.bf16.mxu0 0
    %906 = vmatpush1.bf16.msra.mxu0 %v867
    %907 = vmatprep.subr.bf16.mxu0 0
    %908 = vmatpush1.bf16.msra.mxu0 %v868
    %909 = vmatprep.subr.bf16.mxu0 0
    %910 = vmatpush1.bf16.msra.mxu0 %v869
    %911 = vmatprep.subr.bf16.mxu0 0
    %912 = vmatpush1.bf16.msra.mxu0 %v870
    %913 = vmatprep.subr.bf16.mxu0 0
    %914 = vmatpush1.bf16.msra.mxu0 %v871
    %915 = vmatprep.subr.bf16.mxu0 0
    %916 = vmatpush1.bf16.msra.mxu0 %v872
    %917 = vmatprep.subr.bf16.mxu0 0
    %918 = vmatpush1.bf16.msra.mxu0 %v873
    %919 = vmatprep.subr.bf16.mxu0 0
    %920 = vmatpush1.bf16.msra.mxu0 %v874
    %921 = vmatprep.subr.bf16.mxu0 0
    %922 = vmatpush1.bf16.msra.mxu0 %v875
    %923 = vmatprep.subr.bf16.mxu0 0
    %924 = vmatpush1.bf16.msra.mxu0 %v876
    %925 = vmatprep.mubr.bf16.mxu0 %v757
    %926 = vmatmul.mubr.bf16.gmra.mrb[0].mxu0 %v756
    %v927 = vpop.f32.mrb[0].mxu0
    %v928 = vadd.f32 %v795, %v927
    %v929 = vpop.f32.mrb[0].mxu0
    %v930 = vpop.f32.mrb[0].mxu0
    %v931 = vpop.f32.mrb[0].mxu0
    %932 = vdwg.mxu0
    %v933 = vld [vmem:[%s9] sm:$0x1]
    %v935 = vlaneseq
    %v936 = vshrl.u32 %v935, 7
    %v937 = vsub.s32 0, %v936
    %v938 = vrot.slane %v933, %v937
    %v940 = vmax.f32 %v928, %v938
    %v941 = vld [vmem:[%s10] sm:$0x1]
    %v943 = vlaneseq
    %v944 = vshrl.u32 %v943, 7
    %v945 = vsub.s32 0, %v944
    %v946 = vrot.slane %v941, %v945
    %v948 = vmin.f32 %v940, %v946
    %v949 = vpack.c.bf16 %v948, %v948
    %950 = vst [vmem:[#allocation11] sm:$0xf] %v949
    // Predicated region
    $region66: #{tpu_custom_call.1} parent=1 // pred_check
      _
    $region67: #{tpu_custom_call.1} parent=1 // pred_check_branch
      %952 = sbr.rel (0) target = $region69
    $region68: #{tpu_custom_call.1} parent=1 // pred_region
      %s954 = ssub.s32 64, 64
      %955 = vsyncadd [#allocation4], %s954
      %s957 = sshll.u32 [#allocation11], 4
      %s958 = int_to_ptr.vmem [resolvable:$true] %s957
      %960 = dma.vmem_to_hbm [thread:$0]  %s958, 64, %s11, [#allocation4]
    $region69: #{tpu_custom_call.1} parent=1 // pred_fallthru
      _
    // Predicated region
    $region70: #{tpu_custom_call.1} parent=1 // pred_check
      _
    $region71: #{tpu_custom_call.1} parent=1 // pred_check_branch
      %962 = sbr.rel (0) target = $region73
    $region72: #{tpu_custom_call.1} parent=1 // pred_region
      %963 = dma.done [#allocation4], 64
    $region73: #{tpu_custom_call.1} parent=1 // pred_fallthru
      _
    %964 = vsyncpa [#allocation3], 1
    %965 = vsyncpa [#allocation6], 1
    %966 = vsyncpa [#allocation9], 1
    %967 = vsyncpa [#allocation4], 1

</llo_original>
